<compile_context>
chip_gen: v5e
topology: v5e:2x2
jax: 0.10.0
libtpu: 0.0.40
codegen_flags: <defaults>
</compile_context>

<pallas_src>
import jax
import jax.numpy as jnp
from jax.experimental import pallas as pl
from jax.experimental.pallas import tpu as pltpu

GATE_PAD = 128  # per-gate lane width inside the kernel (whole vreg)


# --------------------------- fused forward kernel ----------------------------
def fused_forward_kernel(idx_ref,   # (B, 3) int32  [p1 | p2 | tournoi]
                         a_ref,     # (N, N)        normalized adjacency
                         gx_ref,    # (N, 2)        node features
                         g1_ref,    # (3, GH)       rows 0-1 = W, row 2 = b
                         g2_ref,    # (GH+1, D)     rows 0..GH-1 = W, row GH = b
                         emb_ref,   # (NT, D)       tournament embedding table
                         seq_ref,   # (T*2B, I)     time-major stacked sequences
                         gru_ref,   # (GP+I+2, 3GP) [whh | wih | bih | bhh]
                         sf_ref,    # (B, S)        static features
                         w1_ref,    # (S+3D+2GP+1, 512)  segment row blocks + b1
                         w2_ref,    # (513, 256)
                         w3_ref,    # (257, 64)
                         w4_ref,    # (65, 2)
                         out_ref):  # (B, 2)
    f32 = jnp.float32
    B = out_ref.shape[0]
    N = a_ref.shape[0]
    NT = emb_ref.shape[0]
    GH = g2_ref.shape[0] - 1
    D = g2_ref.shape[1]
    S = sf_ref.shape[1]
    I = seq_ref.shape[1]
    GP = gru_ref.shape[1] // 3
    B2 = 2 * B
    T = seq_ref.shape[0] // B2

    def mm(a, b):
        return jnp.dot(a, b, preferred_element_type=f32)

    # ---- GCN: relu(A @ relu(A @ (X W1) + b1) W2 + b2); A_hat resident in VMEM.
    a = a_ref[...]
    h1 = jnp.maximum(mm(a, mm(gx_ref[...], g1_ref[0:2, :])) + g1_ref[2:3, :], 0.0)
    nodes = jnp.maximum(mm(a, mm(h1, g2_ref[0:GH, :])) + g2_ref[GH:GH + 1, :], 0.0)

    # ---- GRU: both players batched on rows (2B). Gate blocks [r | z | n], each
    #      padded to GP=128 lanes, so gate slices below are whole vregs.
    whh = gru_ref[0:GP, :]
    wih = gru_ref[GP:GP + I, :]
    bih = gru_ref[GP + I:GP + I + 1, :]
    bhh = gru_ref[GP + I + 1:GP + I + 2, :]
    # All T input projections fused into a single MXU matmul (off serial path).
    xp_all = mm(seq_ref[...], wih) + bih                    # (T*2B, 3*GP)
    h = jnp.zeros((B2, GP), f32)
    for t in range(T):                                      # static, unrolled
        xp = xp_all[t * B2:(t + 1) * B2, :]
        gh = mm(h, whh) + bhh
        r = jax.nn.sigmoid(xp[:, 0:GP] + gh[:, 0:GP])
        z = jax.nn.sigmoid(xp[:, GP:2 * GP] + gh[:, GP:2 * GP])
        n = jnp.tanh(xp[:, 2 * GP:3 * GP] + r * gh[:, 2 * GP:3 * GP])
        h = (1.0 - z) * n + z * h
    # Padded lanes stay exactly 0: xp=gh=0 there => r=z=0.5, n=0, h'=0.5*h_pad=0.

    # ---- one-hot MXU gathers (no scalar-serialized row reads).
    idx = idx_ref[...]
    iota_n = jax.lax.broadcasted_iota(jnp.int32, (B, N), 1)
    iota_t = jax.lax.broadcasted_iota(jnp.int32, (B, NT), 1)
    sel_p1 = (iota_n == idx[:, 0:1]).astype(f32)
    sel_p2 = (iota_n == idx[:, 1:2]).astype(f32)
    sel_tt = (iota_t == idx[:, 2:3]).astype(f32)
    p1_emb = mm(sel_p1, nodes)
    p2_emb = mm(sel_p2, nodes)
    tt_emb = mm(sel_tt, emb_ref[...])

    # ---- classifier: combined = [static | p1 | p2 | emb | form1 | form2].
    #      Assembled implicitly as a sum of per-segment partial matmuls
    #      against 8-aligned row blocks of W1 (dropout = identity at inference).
    o1, o2, o3 = S + D, S + 2 * D, S + 3 * D
    o4, o5 = S + 3 * D + GP, S + 3 * D + 2 * GP
    z1 = (mm(sf_ref[...], w1_ref[0:S, :])
          + mm(p1_emb, w1_ref[S:o1, :])
          + mm(p2_emb, w1_ref[o1:o2, :])
          + mm(tt_emb, w1_ref[o2:o3, :])
          + mm(h[0:B, :], w1_ref[o3:o4, :])       # form_player1 (GP-padded rows)
          + mm(h[B:B2, :], w1_ref[o4:o5, :])      # form_player2
          + w1_ref[o5:o5 + 1, :])
    z1 = jnp.maximum(z1, 0.0)

    k2 = w2_ref.shape[0] - 1
    z2 = jnp.maximum(mm(z1, w2_ref[0:k2, :]) + w2_ref[k2:k2 + 1, :], 0.0)
    k3 = w3_ref.shape[0] - 1
    z3 = jnp.maximum(mm(z2, w3_ref[0:k3, :]) + w3_ref[k3:k3 + 1, :], 0.0)
    k4 = w4_ref.shape[0] - 1
    out_ref[...] = mm(z3, w4_ref[0:k4, :]) + w4_ref[k4:k4 + 1, :]


def fused_forward(params, idx, a_hat, graph_x, seq_flat, static_feat):
    B = static_feat.shape[0]
    vspec = pl.BlockSpec(memory_space=pltpu.MemorySpace.VMEM)
    return pl.pallas_call(
        fused_forward_kernel,
        out_shape=jax.ShapeDtypeStruct((B, 2), jnp.float32),
        in_specs=[vspec] * 13,
        out_specs=vspec,
    )(idx, a_hat, graph_x,
      params["g1"], params["g2"], params["emb"],
      seq_flat, params["gru"], static_feat,
      params["w1"], params["w2"], params["w3"], params["w4"])


# ------------------------- graph normalization (glue) ------------------------
def build_gcn_adj(edge_index, edge_weight, num_nodes):
    """Dense GCN-normalized adjacency with self loops (PyG gcn_norm convention):
       A_hat[dst, src] = d^{-1/2}[src] * w * d^{-1/2}[dst], degree from dst side."""
    # TODO(synk): sparse scatter-add has no clean Pallas equivalent at this size;
    # kept as tiny XLA glue feeding the kernel.
    src, dst = edge_index[0], edge_index[1]
    loop = jnp.arange(num_nodes, dtype=src.dtype)
    src = jnp.concatenate([src, loop])
    dst = jnp.concatenate([dst, loop])
    ew = jnp.concatenate([edge_weight,
                          jnp.ones((num_nodes,), dtype=edge_weight.dtype)])
    deg = jnp.zeros((num_nodes,), jnp.float32).at[dst].add(ew)
    dinv = jnp.where(deg > 0, jax.lax.rsqrt(deg), 0.0)
    norm = dinv[src] * ew * dinv[dst]
    return jnp.zeros((num_nodes, num_nodes), jnp.float32).at[dst, src].add(norm)


# ------------------------------- parameters ----------------------------------
def init_params(key, static_dim, num_players, num_tournois, d_model,
                gnn_hidden, perf_dim):
    GP = GATE_PAD
    keys = jax.random.split(key, 12)

    def uni(k, shape, s):
        return jax.random.uniform(k, shape, jnp.float32, -s, s)

    def lin(k, fin, fout):
        s = 1.0 / jnp.sqrt(jnp.float32(fin))
        kw, kb = jax.random.split(k)
        return uni(kw, (fin, fout), s), uni(kb, (1, fout), s)

    # GCN: GCNConv(2, gnn_hidden), GCNConv(gnn_hidden, d_model) -> packed slabs.
    gw1, gb1 = lin(keys[0], 2, gnn_hidden)
    gw2, gb2 = lin(keys[1], gnn_hidden, d_model)
    g1 = jnp.concatenate([gw1, gb1], axis=0)                 # (3, GH)
    g2 = jnp.concatenate([gw2, gb2], axis=0)                 # (GH+1, D)

    emb = jax.random.normal(keys[2], (num_tournois, d_model), jnp.float32)

    # GRU (1 layer), gate order [r | z | n]; each gate padded to GP lanes.
    H = d_model
    s = 1.0 / jnp.sqrt(jnp.float32(H))

    def pad_gates(w):                                        # (rows, 3H)->(rows, 3GP)
        out = jnp.zeros((w.shape[0], 3 * GP), jnp.float32)
        for g in range(3):
            out = out.at[:, g * GP:g * GP + H].set(w[:, g * H:(g + 1) * H])
        return out

    wih = pad_gates(uni(keys[3], (perf_dim, 3 * H), s))                    # (I, 3GP)
    whh = jnp.zeros((GP, 3 * GP), jnp.float32).at[:H, :].set(
        pad_gates(uni(keys[4], (H, 3 * H), s)))                            # (GP, 3GP)
    bih = pad_gates(uni(keys[5], (1, 3 * H), s))
    bhh = pad_gates(uni(keys[6], (1, 3 * H), s))
    gru = jnp.concatenate([whh, wih, bih, bhh], axis=0)      # (GP+I+2, 3GP)

    # Classifier: total_input_dim -> 512 -> 256 -> 64 -> 2.
    S, D = static_dim, d_model
    tot = S + 5 * D
    w1, b1 = lin(keys[7], tot, 512)
    pad = jnp.zeros((GP - D, 512), jnp.float32)
    w1_slab = jnp.concatenate(
        [w1[0:S], w1[S:S + D], w1[S + D:S + 2 * D], w1[S + 2 * D:S + 3 * D],
         jnp.concatenate([w1[S + 3 * D:S + 4 * D], pad], axis=0),   # form1 -> GP rows
         jnp.concatenate([w1[S + 4 * D:S + 5 * D], pad], axis=0),   # form2 -> GP rows
         b1], axis=0)                                               # (S+3D+2GP+1, 512)

    w2, b2 = lin(keys[8], 512, 256)
    w3, b3 = lin(keys[9], 256, 64)
    w4, b4 = lin(keys[10], 64, 2)

    return {"g1": g1, "g2": g2, "emb": emb, "gru": gru,
            "w1": w1_slab,
            "w2": jnp.concatenate([w2, b2], axis=0),
            "w3": jnp.concatenate([w3, b3], axis=0),
            "w4": jnp.concatenate([w4, b4], axis=0)}


# -------------------------------- forward ------------------------------------
def forward(params, static_feat, player1_idx, player2_idx, tournoi_idx,
            graph_x, edge_index, edge_attr, player1_seq, player2_seq):
    num_nodes = graph_x.shape[0]
    a_hat = build_gcn_adj(edge_index, edge_attr, num_nodes)
    B, T, I = player1_seq.shape
    # Stack both players on the batch axis, go time-major, flatten to 2-D so the
    # kernel can do ONE fused input-projection matmul over all timesteps.
    seq_flat = jnp.transpose(
        jnp.concatenate([player1_seq, player2_seq], axis=0), (1, 0, 2)
    ).reshape(T * 2 * B, I)
    idx = jnp.stack([player1_idx, player2_idx, tournoi_idx], axis=1).astype(jnp.int32)
    return fused_forward(params, idx, a_hat, graph_x, seq_flat, static_feat)


# --------------------------- pure-JAX reference -------------------------------
def reference_forward(params, static_feat, p1_idx, p2_idx, t_idx,
                      graph_x, edge_index, edge_attr, p1_seq, p2_seq):
    GP = GATE_PAD
    g1, g2 = params["g1"], params["g2"]
    D = g2.shape[1]
    a = build_gcn_adj(edge_index, edge_attr, graph_x.shape[0])
    x = jnp.maximum(a @ (graph_x @ g1[:-1]) + g1[-1:], 0.0)
    x = jnp.maximum(a @ (x @ g2[:-1]) + g2[-1:], 0.0)
    ep1, ep2, et = x[p1_idx], x[p2_idx], params["emb"][t_idx]

    I = p1_seq.shape[2]
    gru = params["gru"]

    def unpad(w):
        return jnp.concatenate([w[..., g * GP:g * GP + D] for g in range(3)], axis=-1)

    whh = unpad(gru[:D])
    wih = unpad(gru[GP:GP + I])
    bih = unpad(gru[GP + I:GP + I + 1])[0]
    bhh = unpad(gru[GP + I + 1:GP + I + 2])[0]

    def run_gru(seq):
        h = jnp.zeros((seq.shape[0], D), jnp.float32)
        for t in range(seq.shape[1]):
            xp = seq[:, t] @ wih + bih
            gh = h @ whh + bhh
            r = jax.nn.sigmoid(xp[:, :D] + gh[:, :D])
            z = jax.nn.sigmoid(xp[:, D:2 * D] + gh[:, D:2 * D])
            n = jnp.tanh(xp[:, 2 * D:] + r * gh[:, 2 * D:])
            h = (1.0 - z) * n + z * h
        return h

    f1, f2 = run_gru(p1_seq), run_gru(p2_seq)
    comb = jnp.concatenate([static_feat, ep1, ep2, et, f1, f2], axis=1)

    S = static_feat.shape[1]
    w1 = params["w1"]
    w1_dense = jnp.concatenate([w1[:S + 3 * D],
                                w1[S + 3 * D:S + 3 * D + D],
                                w1[S + 3 * D + GP:S + 3 * D + GP + D]], axis=0)
    b1 = w1[S + 3 * D + 2 * GP]
    z = jnp.maximum(comb @ w1_dense + b1, 0.0)
    w2 = params["w2"]; z = jnp.maximum(z @ w2[:-1] + w2[-1], 0.0)
    w3 = params["w3"]; z = jnp.maximum(z @ w3[:-1] + w3[-1], 0.0)
    w4 = params["w4"]
    return z @ w4[:-1] + w4[-1]


# ---------------------------------- main --------------------------------------
if __name__ == "__main__":
    STATIC_DIM, NUM_PLAYERS, NUM_TOURNOIS = 16, 8, 10
    D_MODEL, GNN_HIDDEN, PERF_DIM = 32, 16, 8
    SEQ_LEN, BATCH, NUM_EDGES = 5, 2, 12

    root = jax.random.PRNGKey(0)
    kp, k1, k2, k3, k4, k5, k6, k7, k8, k9 = jax.random.split(root, 10)

    params = init_params(kp, STATIC_DIM, NUM_PLAYERS, NUM_TOURNOIS,
                         D_MODEL, GNN_HIDDEN, PERF_DIM)

    static_feat = jax.random.normal(k1, (BATCH, STATIC_DIM), jnp.float32)
    player1_idx = jax.random.randint(k2, (BATCH,), 0, NUM_PLAYERS)
    player2_idx = jax.random.randint(k3, (BATCH,), 0, NUM_PLAYERS)
    tournoi_idx = jax.random.randint(k4, (BATCH,), 0, NUM_TOURNOIS)
    graph_x = jax.random.normal(k5, (NUM_PLAYERS, 2), jnp.float32)
    edge_index = jax.random.randint(k6, (2, NUM_EDGES), 0, NUM_PLAYERS)
    edge_attr = jax.random.uniform(k7, (NUM_EDGES,), jnp.float32, 0.1, 1.0)
    player1_seq = jax.random.normal(k8, (BATCH, SEQ_LEN, PERF_DIM), jnp.float32)
    player2_seq = jax.random.normal(k9, (BATCH, SEQ_LEN, PERF_DIM), jnp.float32)

    fwd = jax.jit(forward)
    out = jax.block_until_ready(
        fwd(params, static_feat, player1_idx, player2_idx, tournoi_idx,
            graph_x, edge_index, edge_attr, player1_seq, player2_seq))

    assert out.shape == (BATCH, 2) and out.dtype == jnp.float32
    assert bool(jnp.all(jnp.isfinite(out)))

    ref = reference_forward(params, static_feat, player1_idx, player2_idx,
                            tournoi_idx, graph_x, edge_index, edge_attr,
                            player1_seq, player2_seq)
    assert bool(jnp.allclose(out, ref, rtol=2e-2, atol=2e-2))
    print("KERNEL_OK")
</pallas_src>

<mosaic_0001>
module attributes {stable_mosaic.version = 11 : i64} {
  func.func @fused_forward_kernel(%arg0: memref<2x3xi32, #tpu.memory_space<vmem>>, %arg1: memref<8x8xf32, #tpu.memory_space<vmem>>, %arg2: memref<8x2xf32, #tpu.memory_space<vmem>>, %arg3: memref<3x16xf32, #tpu.memory_space<vmem>>, %arg4: memref<17x32xf32, #tpu.memory_space<vmem>>, %arg5: memref<10x32xf32, #tpu.memory_space<vmem>>, %arg6: memref<20x8xf32, #tpu.memory_space<vmem>>, %arg7: memref<138x384xf32, #tpu.memory_space<vmem>>, %arg8: memref<2x16xf32, #tpu.memory_space<vmem>>, %arg9: memref<369x512xf32, #tpu.memory_space<vmem>>, %arg10: memref<513x256xf32, #tpu.memory_space<vmem>>, %arg11: memref<257x64xf32, #tpu.memory_space<vmem>>, %arg12: memref<65x2xf32, #tpu.memory_space<vmem>>, %arg13: memref<2x2xf32, #tpu.memory_space<vmem>>) attributes {dimension_semantics = [], scalar_prefetch = 0 : i64, scratch_operands = 0 : i64, tpu.core_type = #tpu.core_type<tc>} {
    %c0 = arith.constant 0 : index
    %c0_0 = arith.constant 0 : index
    %0 = vector.load %arg1[%c0, %c0_0] : memref<8x8xf32, #tpu.memory_space<vmem>>, vector<8x8xf32>
    %c0_1 = arith.constant 0 : index
    %c0_2 = arith.constant 0 : index
    %1 = vector.load %arg2[%c0_1, %c0_2] : memref<8x2xf32, #tpu.memory_space<vmem>>, vector<8x2xf32>
    %c0_3 = arith.constant 0 : index
    %c0_4 = arith.constant 0 : index
    %2 = vector.load %arg3[%c0_3, %c0_4] : memref<3x16xf32, #tpu.memory_space<vmem>>, vector<2x16xf32>
    %cst = arith.constant dense<0.000000e+00> : vector<8x16xf32>
    %3 = tpu.matmul %1, %2, %cst {dimension_numbers = #tpu.dot_dimension_numbers<[1], [0], [0], [1], [0, 0, 1, 1], [], []>} : vector<8x2xf32>, vector<2x16xf32>, vector<8x16xf32> -> vector<8x16xf32>
    %cst_5 = arith.constant dense<0.000000e+00> : vector<8x16xf32>
    %4 = tpu.matmul %0, %3, %cst_5 {dimension_numbers = #tpu.dot_dimension_numbers<[1], [0], [0], [1], [0, 0, 1, 1], [], []>} : vector<8x8xf32>, vector<8x16xf32>, vector<8x16xf32> -> vector<8x16xf32>
    %c2 = arith.constant 2 : index
    %c0_6 = arith.constant 0 : index
    %5 = vector.load %arg3[%c2, %c0_6] : memref<3x16xf32, #tpu.memory_space<vmem>>, vector<1x16xf32>
    %6 = vector.broadcast %5 : vector<1x16xf32> to vector<8x16xf32>
    %7 = arith.addf %4, %6 : vector<8x16xf32>
    %cst_7 = arith.constant 0.000000e+00 : f32
    %8 = vector.broadcast %cst_7 : f32 to vector<8x16xf32>
    %9 = arith.maximumf %7, %8 : vector<8x16xf32>
    %c0_8 = arith.constant 0 : index
    %c0_9 = arith.constant 0 : index
    %10 = vector.load %arg4[%c0_8, %c0_9] : memref<17x32xf32, #tpu.memory_space<vmem>>, vector<16x32xf32>
    %cst_10 = arith.constant dense<0.000000e+00> : vector<8x32xf32>
    %11 = tpu.matmul %9, %10, %cst_10 {dimension_numbers = #tpu.dot_dimension_numbers<[1], [0], [0], [1], [0, 0, 1, 1], [], []>} : vector<8x16xf32>, vector<16x32xf32>, vector<8x32xf32> -> vector<8x32xf32>
    %cst_11 = arith.constant dense<0.000000e+00> : vector<8x32xf32>
    %12 = tpu.matmul %0, %11, %cst_11 {dimension_numbers = #tpu.dot_dimension_numbers<[1], [0], [0], [1], [0, 0, 1, 1], [], []>} : vector<8x8xf32>, vector<8x32xf32>, vector<8x32xf32> -> vector<8x32xf32>
    %c16 = arith.constant 16 : index
    %c0_12 = arith.constant 0 : index
    %13 = vector.load %arg4[%c16, %c0_12] : memref<17x32xf32, #tpu.memory_space<vmem>>, vector<1x32xf32>
    %14 = vector.broadcast %13 : vector<1x32xf32> to vector<8x32xf32>
    %15 = arith.addf %12, %14 : vector<8x32xf32>
    %cst_13 = arith.constant 0.000000e+00 : f32
    %16 = vector.broadcast %cst_13 : f32 to vector<8x32xf32>
    %17 = arith.maximumf %15, %16 : vector<8x32xf32>
    %c0_14 = arith.constant 0 : index
    %c0_15 = arith.constant 0 : index
    %18 = vector.load %arg7[%c0_14, %c0_15] : memref<138x384xf32, #tpu.memory_space<vmem>>, vector<128x384xf32>
    %c128 = arith.constant 128 : index
    %c0_16 = arith.constant 0 : index
    %19 = vector.load %arg7[%c128, %c0_16] : memref<138x384xf32, #tpu.memory_space<vmem>>, vector<8x384xf32>
    %c136 = arith.constant 136 : index
    %c0_17 = arith.constant 0 : index
    %20 = vector.load %arg7[%c136, %c0_17] : memref<138x384xf32, #tpu.memory_space<vmem>>, vector<1x384xf32>
    %c137 = arith.constant 137 : index
    %c0_18 = arith.constant 0 : index
    %21 = vector.load %arg7[%c137, %c0_18] : memref<138x384xf32, #tpu.memory_space<vmem>>, vector<1x384xf32>
    %c0_19 = arith.constant 0 : index
    %c0_20 = arith.constant 0 : index
    %22 = vector.load %arg6[%c0_19, %c0_20] : memref<20x8xf32, #tpu.memory_space<vmem>>, vector<20x8xf32>
    %cst_21 = arith.constant dense<0.000000e+00> : vector<20x384xf32>
    %23 = tpu.matmul %22, %19, %cst_21 {dimension_numbers = #tpu.dot_dimension_numbers<[1], [0], [0], [1], [0, 0, 1, 1], [], []>} : vector<20x8xf32>, vector<8x384xf32>, vector<20x384xf32> -> vector<20x384xf32>
    %24 = vector.broadcast %20 : vector<1x384xf32> to vector<20x384xf32>
    %25 = arith.addf %23, %24 : vector<20x384xf32>
    %cst_22 = arith.constant 0.000000e+00 : f32
    %26 = vector.broadcast %cst_22 : f32 to vector<4x128xf32>
    %27 = vector.extract_strided_slice %25 {offsets = [0, 0], sizes = [4, 384], strides = [1, 1]} : vector<20x384xf32> to vector<4x384xf32>
    %cst_23 = arith.constant dense<0.000000e+00> : vector<4x384xf32>
    %28 = tpu.matmul %26, %18, %cst_23 {dimension_numbers = #tpu.dot_dimension_numbers<[1], [0], [0], [1], [0, 0, 1, 1], [], []>} : vector<4x128xf32>, vector<128x384xf32>, vector<4x384xf32> -> vector<4x384xf32>
    %29 = vector.broadcast %21 : vector<1x384xf32> to vector<4x384xf32>
    %30 = arith.addf %28, %29 : vector<4x384xf32>
    %31 = vector.extract_strided_slice %27 {offsets = [0, 0], sizes = [4, 128], strides = [1, 1]} : vector<4x384xf32> to vector<4x128xf32>
    %32 = vector.extract_strided_slice %30 {offsets = [0, 0], sizes = [4, 128], strides = [1, 1]} : vector<4x384xf32> to vector<4x128xf32>
    %33 = arith.addf %31, %32 : vector<4x128xf32>
    %34 = arith.negf %33 : vector<4x128xf32>
    %35 = math.exp %34 : vector<4x128xf32>
    %cst_24 = arith.constant 1.000000e+00 : f32
    %36 = vector.broadcast %cst_24 : f32 to vector<4x128xf32>
    %37 = arith.addf %36, %35 : vector<4x128xf32>
    %38 = arith.divf %36, %37 : vector<4x128xf32>
    %39 = vector.extract_strided_slice %27 {offsets = [0, 128], sizes = [4, 128], strides = [1, 1]} : vector<4x384xf32> to vector<4x128xf32>
    %40 = vector.extract_strided_slice %30 {offsets = [0, 128], sizes = [4, 128], strides = [1, 1]} : vector<4x384xf32> to vector<4x128xf32>
    %41 = arith.addf %39, %40 : vector<4x128xf32>
    %42 = arith.negf %41 : vector<4x128xf32>
    %43 = math.exp %42 : vector<4x128xf32>
    %cst_25 = arith.constant 1.000000e+00 : f32
    %44 = vector.broadcast %cst_25 : f32 to vector<4x128xf32>
    %45 = arith.addf %44, %43 : vector<4x128xf32>
    %46 = arith.divf %44, %45 : vector<4x128xf32>
    %47 = vector.extract_strided_slice %27 {offsets = [0, 256], sizes = [4, 128], strides = [1, 1]} : vector<4x384xf32> to vector<4x128xf32>
    %48 = vector.extract_strided_slice %30 {offsets = [0, 256], sizes = [4, 128], strides = [1, 1]} : vector<4x384xf32> to vector<4x128xf32>
    %49 = arith.mulf %38, %48 : vector<4x128xf32>
    %50 = arith.addf %47, %49 : vector<4x128xf32>
    %51 = math.tanh %50 : vector<4x128xf32>
    %cst_26 = arith.constant 1.000000e+00 : f32
    %52 = vector.broadcast %cst_26 : f32 to vector<4x128xf32>
    %53 = arith.subf %52, %46 : vector<4x128xf32>
    %54 = arith.mulf %53, %51 : vector<4x128xf32>
    %55 = arith.mulf %46, %26 : vector<4x128xf32>
    %56 = arith.addf %54, %55 : vector<4x128xf32>
    %57 = vector.extract_strided_slice %25 {offsets = [4, 0], sizes = [4, 384], strides = [1, 1]} : vector<20x384xf32> to vector<4x384xf32>
    %cst_27 = arith.constant dense<0.000000e+00> : vector<4x384xf32>
    %58 = tpu.matmul %56, %18, %cst_27 {dimension_numbers = #tpu.dot_dimension_numbers<[1], [0], [0], [1], [0, 0, 1, 1], [], []>} : vector<4x128xf32>, vector<128x384xf32>, vector<4x384xf32> -> vector<4x384xf32>
    %59 = vector.broadcast %21 : vector<1x384xf32> to vector<4x384xf32>
    %60 = arith.addf %58, %59 : vector<4x384xf32>
    %61 = vector.extract_strided_slice %57 {offsets = [0, 0], sizes = [4, 128], strides = [1, 1]} : vector<4x384xf32> to vector<4x128xf32>
    %62 = vector.extract_strided_slice %60 {offsets = [0, 0], sizes = [4, 128], strides = [1, 1]} : vector<4x384xf32> to vector<4x128xf32>
    %63 = arith.addf %61, %62 : vector<4x128xf32>
    %64 = arith.negf %63 : vector<4x128xf32>
    %65 = math.exp %64 : vector<4x128xf32>
    %cst_28 = arith.constant 1.000000e+00 : f32
    %66 = vector.broadcast %cst_28 : f32 to vector<4x128xf32>
    %67 = arith.addf %66, %65 : vector<4x128xf32>
    %68 = arith.divf %66, %67 : vector<4x128xf32>
    %69 = vector.extract_strided_slice %57 {offsets = [0, 128], sizes = [4, 128], strides = [1, 1]} : vector<4x384xf32> to vector<4x128xf32>
    %70 = vector.extract_strided_slice %60 {offsets = [0, 128], sizes = [4, 128], strides = [1, 1]} : vector<4x384xf32> to vector<4x128xf32>
    %71 = arith.addf %69, %70 : vector<4x128xf32>
    %72 = arith.negf %71 : vector<4x128xf32>
    %73 = math.exp %72 : vector<4x128xf32>
    %cst_29 = arith.constant 1.000000e+00 : f32
    %74 = vector.broadcast %cst_29 : f32 to vector<4x128xf32>
    %75 = arith.addf %74, %73 : vector<4x128xf32>
    %76 = arith.divf %74, %75 : vector<4x128xf32>
    %77 = vector.extract_strided_slice %57 {offsets = [0, 256], sizes = [4, 128], strides = [1, 1]} : vector<4x384xf32> to vector<4x128xf32>
    %78 = vector.extract_strided_slice %60 {offsets = [0, 256], sizes = [4, 128], strides = [1, 1]} : vector<4x384xf32> to vector<4x128xf32>
    %79 = arith.mulf %68, %78 : vector<4x128xf32>
    %80 = arith.addf %77, %79 : vector<4x128xf32>
    %81 = math.tanh %80 : vector<4x128xf32>
    %cst_30 = arith.constant 1.000000e+00 : f32
    %82 = vector.broadcast %cst_30 : f32 to vector<4x128xf32>
    %83 = arith.subf %82, %76 : vector<4x128xf32>
    %84 = arith.mulf %83, %81 : vector<4x128xf32>
    %85 = arith.mulf %76, %56 : vector<4x128xf32>
    %86 = arith.addf %84, %85 : vector<4x128xf32>
    %87 = vector.extract_strided_slice %25 {offsets = [8, 0], sizes = [4, 384], strides = [1, 1]} : vector<20x384xf32> to vector<4x384xf32>
    %cst_31 = arith.constant dense<0.000000e+00> : vector<4x384xf32>
    %88 = tpu.matmul %86, %18, %cst_31 {dimension_numbers = #tpu.dot_dimension_numbers<[1], [0], [0], [1], [0, 0, 1, 1], [], []>} : vector<4x128xf32>, vector<128x384xf32>, vector<4x384xf32> -> vector<4x384xf32>
    %89 = vector.broadcast %21 : vector<1x384xf32> to vector<4x384xf32>
    %90 = arith.addf %88, %89 : vector<4x384xf32>
    %91 = vector.extract_strided_slice %87 {offsets = [0, 0], sizes = [4, 128], strides = [1, 1]} : vector<4x384xf32> to vector<4x128xf32>
    %92 = vector.extract_strided_slice %90 {offsets = [0, 0], sizes = [4, 128], strides = [1, 1]} : vector<4x384xf32> to vector<4x128xf32>
    %93 = arith.addf %91, %92 : vector<4x128xf32>
    %94 = arith.negf %93 : vector<4x128xf32>
    %95 = math.exp %94 : vector<4x128xf32>
    %cst_32 = arith.constant 1.000000e+00 : f32
    %96 = vector.broadcast %cst_32 : f32 to vector<4x128xf32>
    %97 = arith.addf %96, %95 : vector<4x128xf32>
    %98 = arith.divf %96, %97 : vector<4x128xf32>
    %99 = vector.extract_strided_slice %87 {offsets = [0, 128], sizes = [4, 128], strides = [1, 1]} : vector<4x384xf32> to vector<4x128xf32>
    %100 = vector.extract_strided_slice %90 {offsets = [0, 128], sizes = [4, 128], strides = [1, 1]} : vector<4x384xf32> to vector<4x128xf32>
    %101 = arith.addf %99, %100 : vector<4x128xf32>
    %102 = arith.negf %101 : vector<4x128xf32>
    %103 = math.exp %102 : vector<4x128xf32>
    %cst_33 = arith.constant 1.000000e+00 : f32
    %104 = vector.broadcast %cst_33 : f32 to vector<4x128xf32>
    %105 = arith.addf %104, %103 : vector<4x128xf32>
    %106 = arith.divf %104, %105 : vector<4x128xf32>
    %107 = vector.extract_strided_slice %87 {offsets = [0, 256], sizes = [4, 128], strides = [1, 1]} : vector<4x384xf32> to vector<4x128xf32>
    %108 = vector.extract_strided_slice %90 {offsets = [0, 256], sizes = [4, 128], strides = [1, 1]} : vector<4x384xf32> to vector<4x128xf32>
    %109 = arith.mulf %98, %108 : vector<4x128xf32>
    %110 = arith.addf %107, %109 : vector<4x128xf32>
    %111 = math.tanh %110 : vector<4x128xf32>
    %cst_34 = arith.constant 1.000000e+00 : f32
    %112 = vector.broadcast %cst_34 : f32 to vector<4x128xf32>
    %113 = arith.subf %112, %106 : vector<4x128xf32>
    %114 = arith.mulf %113, %111 : vector<4x128xf32>
    %115 = arith.mulf %106, %86 : vector<4x128xf32>
    %116 = arith.addf %114, %115 : vector<4x128xf32>
    %117 = vector.extract_strided_slice %25 {offsets = [12, 0], sizes = [4, 384], strides = [1, 1]} : vector<20x384xf32> to vector<4x384xf32>
    %cst_35 = arith.constant dense<0.000000e+00> : vector<4x384xf32>
    %118 = tpu.matmul %116, %18, %cst_35 {dimension_numbers = #tpu.dot_dimension_numbers<[1], [0], [0], [1], [0, 0, 1, 1], [], []>} : vector<4x128xf32>, vector<128x384xf32>, vector<4x384xf32> -> vector<4x384xf32>
    %119 = vector.broadcast %21 : vector<1x384xf32> to vector<4x384xf32>
    %120 = arith.addf %118, %119 : vector<4x384xf32>
    %121 = vector.extract_strided_slice %117 {offsets = [0, 0], sizes = [4, 128], strides = [1, 1]} : vector<4x384xf32> to vector<4x128xf32>
    %122 = vector.extract_strided_slice %120 {offsets = [0, 0], sizes = [4, 128], strides = [1, 1]} : vector<4x384xf32> to vector<4x128xf32>
    %123 = arith.addf %121, %122 : vector<4x128xf32>
    %124 = arith.negf %123 : vector<4x128xf32>
    %125 = math.exp %124 : vector<4x128xf32>
    %cst_36 = arith.constant 1.000000e+00 : f32
    %126 = vector.broadcast %cst_36 : f32 to vector<4x128xf32>
    %127 = arith.addf %126, %125 : vector<4x128xf32>
    %128 = arith.divf %126, %127 : vector<4x128xf32>
    %129 = vector.extract_strided_slice %117 {offsets = [0, 128], sizes = [4, 128], strides = [1, 1]} : vector<4x384xf32> to vector<4x128xf32>
    %130 = vector.extract_strided_slice %120 {offsets = [0, 128], sizes = [4, 128], strides = [1, 1]} : vector<4x384xf32> to vector<4x128xf32>
    %131 = arith.addf %129, %130 : vector<4x128xf32>
    %132 = arith.negf %131 : vector<4x128xf32>
    %133 = math.exp %132 : vector<4x128xf32>
    %cst_37 = arith.constant 1.000000e+00 : f32
    %134 = vector.broadcast %cst_37 : f32 to vector<4x128xf32>
    %135 = arith.addf %134, %133 : vector<4x128xf32>
    %136 = arith.divf %134, %135 : vector<4x128xf32>
    %137 = vector.extract_strided_slice %117 {offsets = [0, 256], sizes = [4, 128], strides = [1, 1]} : vector<4x384xf32> to vector<4x128xf32>
    %138 = vector.extract_strided_slice %120 {offsets = [0, 256], sizes = [4, 128], strides = [1, 1]} : vector<4x384xf32> to vector<4x128xf32>
    %139 = arith.mulf %128, %138 : vector<4x128xf32>
    %140 = arith.addf %137, %139 : vector<4x128xf32>
    %141 = math.tanh %140 : vector<4x128xf32>
    %cst_38 = arith.constant 1.000000e+00 : f32
    %142 = vector.broadcast %cst_38 : f32 to vector<4x128xf32>
    %143 = arith.subf %142, %136 : vector<4x128xf32>
    %144 = arith.mulf %143, %141 : vector<4x128xf32>
    %145 = arith.mulf %136, %116 : vector<4x128xf32>
    %146 = arith.addf %144, %145 : vector<4x128xf32>
    %147 = vector.extract_strided_slice %25 {offsets = [16, 0], sizes = [4, 384], strides = [1, 1]} : vector<20x384xf32> to vector<4x384xf32>
    %cst_39 = arith.constant dense<0.000000e+00> : vector<4x384xf32>
    %148 = tpu.matmul %146, %18, %cst_39 {dimension_numbers = #tpu.dot_dimension_numbers<[1], [0], [0], [1], [0, 0, 1, 1], [], []>} : vector<4x128xf32>, vector<128x384xf32>, vector<4x384xf32> -> vector<4x384xf32>
    %149 = vector.broadcast %21 : vector<1x384xf32> to vector<4x384xf32>
    %150 = arith.addf %148, %149 : vector<4x384xf32>
    %151 = vector.extract_strided_slice %147 {offsets = [0, 0], sizes = [4, 128], strides = [1, 1]} : vector<4x384xf32> to vector<4x128xf32>
    %152 = vector.extract_strided_slice %150 {offsets = [0, 0], sizes = [4, 128], strides = [1, 1]} : vector<4x384xf32> to vector<4x128xf32>
    %153 = arith.addf %151, %152 : vector<4x128xf32>
    %154 = arith.negf %153 : vector<4x128xf32>
    %155 = math.exp %154 : vector<4x128xf32>
    %cst_40 = arith.constant 1.000000e+00 : f32
    %156 = vector.broadcast %cst_40 : f32 to vector<4x128xf32>
    %157 = arith.addf %156, %155 : vector<4x128xf32>
    %158 = arith.divf %156, %157 : vector<4x128xf32>
    %159 = vector.extract_strided_slice %147 {offsets = [0, 128], sizes = [4, 128], strides = [1, 1]} : vector<4x384xf32> to vector<4x128xf32>
    %160 = vector.extract_strided_slice %150 {offsets = [0, 128], sizes = [4, 128], strides = [1, 1]} : vector<4x384xf32> to vector<4x128xf32>
    %161 = arith.addf %159, %160 : vector<4x128xf32>
    %162 = arith.negf %161 : vector<4x128xf32>
    %163 = math.exp %162 : vector<4x128xf32>
    %cst_41 = arith.constant 1.000000e+00 : f32
    %164 = vector.broadcast %cst_41 : f32 to vector<4x128xf32>
    %165 = arith.addf %164, %163 : vector<4x128xf32>
    %166 = arith.divf %164, %165 : vector<4x128xf32>
    %167 = vector.extract_strided_slice %147 {offsets = [0, 256], sizes = [4, 128], strides = [1, 1]} : vector<4x384xf32> to vector<4x128xf32>
    %168 = vector.extract_strided_slice %150 {offsets = [0, 256], sizes = [4, 128], strides = [1, 1]} : vector<4x384xf32> to vector<4x128xf32>
    %169 = arith.mulf %158, %168 : vector<4x128xf32>
    %170 = arith.addf %167, %169 : vector<4x128xf32>
    %171 = math.tanh %170 : vector<4x128xf32>
    %cst_42 = arith.constant 1.000000e+00 : f32
    %172 = vector.broadcast %cst_42 : f32 to vector<4x128xf32>
    %173 = arith.subf %172, %166 : vector<4x128xf32>
    %174 = arith.mulf %173, %171 : vector<4x128xf32>
    %175 = arith.mulf %166, %146 : vector<4x128xf32>
    %176 = arith.addf %174, %175 : vector<4x128xf32>
    %c0_43 = arith.constant 0 : index
    %c0_44 = arith.constant 0 : index
    %177 = vector.load %arg0[%c0_43, %c0_44] : memref<2x3xi32, #tpu.memory_space<vmem>>, vector<2x3xi32>
    %178 = tpu.iota {dimensions = array<i32: 1>} : vector<2x8xi32>
    %179 = tpu.iota {dimensions = array<i32: 1>} : vector<2x10xi32>
    %180 = vector.extract_strided_slice %177 {offsets = [0, 0], sizes = [2, 1], strides = [1, 1]} : vector<2x3xi32> to vector<2x1xi32>
    %181 = vector.broadcast %180 : vector<2x1xi32> to vector<2x8xi32>
    %182 = arith.cmpi eq, %178, %181 : vector<2x8xi32>
    %183 = arith.extui %182 : vector<2x8xi1> to vector<2x8xi32>
    %184 = arith.sitofp %183 : vector<2x8xi32> to vector<2x8xf32>
    %185 = vector.extract_strided_slice %177 {offsets = [0, 1], sizes = [2, 1], strides = [1, 1]} : vector<2x3xi32> to vector<2x1xi32>
    %186 = vector.broadcast %185 : vector<2x1xi32> to vector<2x8xi32>
    %187 = arith.cmpi eq, %178, %186 : vector<2x8xi32>
    %188 = arith.extui %187 : vector<2x8xi1> to vector<2x8xi32>
    %189 = arith.sitofp %188 : vector<2x8xi32> to vector<2x8xf32>
    %190 = vector.extract_strided_slice %177 {offsets = [0, 2], sizes = [2, 1], strides = [1, 1]} : vector<2x3xi32> to vector<2x1xi32>
    %191 = vector.broadcast %190 : vector<2x1xi32> to vector<2x10xi32>
    %192 = arith.cmpi eq, %179, %191 : vector<2x10xi32>
    %193 = arith.extui %192 : vector<2x10xi1> to vector<2x10xi32>
    %194 = arith.sitofp %193 : vector<2x10xi32> to vector<2x10xf32>
    %cst_45 = arith.constant dense<0.000000e+00> : vector<2x32xf32>
    %195 = tpu.matmul %184, %17, %cst_45 {dimension_numbers = #tpu.dot_dimension_numbers<[1], [0], [0], [1], [0, 0, 1, 1], [], []>} : vector<2x8xf32>, vector<8x32xf32>, vector<2x32xf32> -> vector<2x32xf32>
    %cst_46 = arith.constant dense<0.000000e+00> : vector<2x32xf32>
    %196 = tpu.matmul %189, %17, %cst_46 {dimension_numbers = #tpu.dot_dimension_numbers<[1], [0], [0], [1], [0, 0, 1, 1], [], []>} : vector<2x8xf32>, vector<8x32xf32>, vector<2x32xf32> -> vector<2x32xf32>
    %c0_47 = arith.constant 0 : index
    %c0_48 = arith.constant 0 : index
    %197 = vector.load %arg5[%c0_47, %c0_48] : memref<10x32xf32, #tpu.memory_space<vmem>>, vector<10x32xf32>
    %cst_49 = arith.constant dense<0.000000e+00> : vector<2x32xf32>
    %198 = tpu.matmul %194, %197, %cst_49 {dimension_numbers = #tpu.dot_dimension_numbers<[1], [0], [0], [1], [0, 0, 1, 1], [], []>} : vector<2x10xf32>, vector<10x32xf32>, vector<2x32xf32> -> vector<2x32xf32>
    %c0_50 = arith.constant 0 : index
    %c0_51 = arith.constant 0 : index
    %199 = vector.load %arg8[%c0_50, %c0_51] : memref<2x16xf32, #tpu.memory_space<vmem>>, vector<2x16xf32>
    %c0_52 = arith.constant 0 : index
    %c0_53 = arith.constant 0 : index
    %200 = vector.load %arg9[%c0_52, %c0_53] : memref<369x512xf32, #tpu.memory_space<vmem>>, vector<16x512xf32>
    %cst_54 = arith.constant dense<0.000000e+00> : vector<2x512xf32>
    %201 = tpu.matmul %199, %200, %cst_54 {dimension_numbers = #tpu.dot_dimension_numbers<[1], [0], [0], [1], [0, 0, 1, 1], [], []>} : vector<2x16xf32>, vector<16x512xf32>, vector<2x512xf32> -> vector<2x512xf32>
    %c16_55 = arith.constant 16 : index
    %c0_56 = arith.constant 0 : index
    %202 = vector.load %arg9[%c16_55, %c0_56] : memref<369x512xf32, #tpu.memory_space<vmem>>, vector<32x512xf32>
    %cst_57 = arith.constant dense<0.000000e+00> : vector<2x512xf32>
    %203 = tpu.matmul %195, %202, %cst_57 {dimension_numbers = #tpu.dot_dimension_numbers<[1], [0], [0], [1], [0, 0, 1, 1], [], []>} : vector<2x32xf32>, vector<32x512xf32>, vector<2x512xf32> -> vector<2x512xf32>
    %204 = arith.addf %201, %203 : vector<2x512xf32>
    %c48 = arith.constant 48 : index
    %c0_58 = arith.constant 0 : index
    %205 = vector.load %arg9[%c48, %c0_58] : memref<369x512xf32, #tpu.memory_space<vmem>>, vector<32x512xf32>
    %cst_59 = arith.constant dense<0.000000e+00> : vector<2x512xf32>
    %206 = tpu.matmul %196, %205, %cst_59 {dimension_numbers = #tpu.dot_dimension_numbers<[1], [0], [0], [1], [0, 0, 1, 1], [], []>} : vector<2x32xf32>, vector<32x512xf32>, vector<2x512xf32> -> vector<2x512xf32>
    %207 = arith.addf %204, %206 : vector<2x512xf32>
    %c80 = arith.constant 80 : index
    %c0_60 = arith.constant 0 : index
    %208 = vector.load %arg9[%c80, %c0_60] : memref<369x512xf32, #tpu.memory_space<vmem>>, vector<32x512xf32>
    %cst_61 = arith.constant dense<0.000000e+00> : vector<2x512xf32>
    %209 = tpu.matmul %198, %208, %cst_61 {dimension_numbers = #tpu.dot_dimension_numbers<[1], [0], [0], [1], [0, 0, 1, 1], [], []>} : vector<2x32xf32>, vector<32x512xf32>, vector<2x512xf32> -> vector<2x512xf32>
    %210 = arith.addf %207, %209 : vector<2x512xf32>
    %211 = vector.extract_strided_slice %176 {offsets = [0, 0], sizes = [2, 128], strides = [1, 1]} : vector<4x128xf32> to vector<2x128xf32>
    %c112 = arith.constant 112 : index
    %c0_62 = arith.constant 0 : index
    %212 = vector.load %arg9[%c112, %c0_62] : memref<369x512xf32, #tpu.memory_space<vmem>>, vector<128x512xf32>
    %cst_63 = arith.constant dense<0.000000e+00> : vector<2x512xf32>
    %213 = tpu.matmul %211, %212, %cst_63 {dimension_numbers = #tpu.dot_dimension_numbers<[1], [0], [0], [1], [0, 0, 1, 1], [], []>} : vector<2x128xf32>, vector<128x512xf32>, vector<2x512xf32> -> vector<2x512xf32>
    %214 = arith.addf %210, %213 : vector<2x512xf32>
    %215 = vector.extract_strided_slice %176 {offsets = [2, 0], sizes = [2, 128], strides = [1, 1]} : vector<4x128xf32> to vector<2x128xf32>
    %c240 = arith.constant 240 : index
    %c0_64 = arith.constant 0 : index
    %216 = vector.load %arg9[%c240, %c0_64] : memref<369x512xf32, #tpu.memory_space<vmem>>, vector<128x512xf32>
    %cst_65 = arith.constant dense<0.000000e+00> : vector<2x512xf32>
    %217 = tpu.matmul %215, %216, %cst_65 {dimension_numbers = #tpu.dot_dimension_numbers<[1], [0], [0], [1], [0, 0, 1, 1], [], []>} : vector<2x128xf32>, vector<128x512xf32>, vector<2x512xf32> -> vector<2x512xf32>
    %218 = arith.addf %214, %217 : vector<2x512xf32>
    %c368 = arith.constant 368 : index
    %c0_66 = arith.constant 0 : index
    %219 = vector.load %arg9[%c368, %c0_66] : memref<369x512xf32, #tpu.memory_space<vmem>>, vector<1x512xf32>
    %220 = vector.broadcast %219 : vector<1x512xf32> to vector<2x512xf32>
    %221 = arith.addf %218, %220 : vector<2x512xf32>
    %cst_67 = arith.constant 0.000000e+00 : f32
    %222 = vector.broadcast %cst_67 : f32 to vector<2x512xf32>
    %223 = arith.maximumf %221, %222 : vector<2x512xf32>
    %c0_68 = arith.constant 0 : index
    %c0_69 = arith.constant 0 : index
    %224 = vector.load %arg10[%c0_68, %c0_69] : memref<513x256xf32, #tpu.memory_space<vmem>>, vector<512x256xf32>
    %cst_70 = arith.constant dense<0.000000e+00> : vector<2x256xf32>
    %225 = tpu.matmul %223, %224, %cst_70 {dimension_numbers = #tpu.dot_dimension_numbers<[1], [0], [0], [1], [0, 0, 1, 1], [], []>} : vector<2x512xf32>, vector<512x256xf32>, vector<2x256xf32> -> vector<2x256xf32>
    %c512 = arith.constant 512 : index
    %c0_71 = arith.constant 0 : index
    %226 = vector.load %arg10[%c512, %c0_71] : memref<513x256xf32, #tpu.memory_space<vmem>>, vector<1x256xf32>
    %227 = vector.broadcast %226 : vector<1x256xf32> to vector<2x256xf32>
    %228 = arith.addf %225, %227 : vector<2x256xf32>
    %cst_72 = arith.constant 0.000000e+00 : f32
    %229 = vector.broadcast %cst_72 : f32 to vector<2x256xf32>
    %230 = arith.maximumf %228, %229 : vector<2x256xf32>
    %c0_73 = arith.constant 0 : index
    %c0_74 = arith.constant 0 : index
    %231 = vector.load %arg11[%c0_73, %c0_74] : memref<257x64xf32, #tpu.memory_space<vmem>>, vector<256x64xf32>
    %cst_75 = arith.constant dense<0.000000e+00> : vector<2x64xf32>
    %232 = tpu.matmul %230, %231, %cst_75 {dimension_numbers = #tpu.dot_dimension_numbers<[1], [0], [0], [1], [0, 0, 1, 1], [], []>} : vector<2x256xf32>, vector<256x64xf32>, vector<2x64xf32> -> vector<2x64xf32>
    %c256 = arith.constant 256 : index
    %c0_76 = arith.constant 0 : index
    %233 = vector.load %arg11[%c256, %c0_76] : memref<257x64xf32, #tpu.memory_space<vmem>>, vector<1x64xf32>
    %234 = vector.broadcast %233 : vector<1x64xf32> to vector<2x64xf32>
    %235 = arith.addf %232, %234 : vector<2x64xf32>
    %cst_77 = arith.constant 0.000000e+00 : f32
    %236 = vector.broadcast %cst_77 : f32 to vector<2x64xf32>
    %237 = arith.maximumf %235, %236 : vector<2x64xf32>
    %c0_78 = arith.constant 0 : index
    %c0_79 = arith.constant 0 : index
    %238 = vector.load %arg12[%c0_78, %c0_79] : memref<65x2xf32, #tpu.memory_space<vmem>>, vector<64x2xf32>
    %cst_80 = arith.constant dense<0.000000e+00> : vector<2x2xf32>
    %239 = tpu.matmul %237, %238, %cst_80 {dimension_numbers = #tpu.dot_dimension_numbers<[1], [0], [0], [1], [0, 0, 1, 1], [], []>} : vector<2x64xf32>, vector<64x2xf32>, vector<2x2xf32> -> vector<2x2xf32>
    %c64 = arith.constant 64 : index
    %c0_81 = arith.constant 0 : index
    %240 = vector.load %arg12[%c64, %c0_81] : memref<65x2xf32, #tpu.memory_space<vmem>>, vector<1x2xf32>
    %241 = vector.broadcast %240 : vector<1x2xf32> to vector<2x2xf32>
    %242 = arith.addf %239, %241 : vector<2x2xf32>
    %c0_82 = arith.constant 0 : index
    %c0_83 = arith.constant 0 : index
    %243 = vector.load %arg13[%c0_82, %c0_83] : memref<2x2xf32, #tpu.memory_space<vmem>>, vector<2x2xf32>
    tpu.vector_store %arg13[%c0_82, %c0_83], %242 {strides = array<i32>} : memref<2x2xf32, #tpu.memory_space<vmem>>, vector<2x2xf32>,
    return
  }
}

</mosaic_0001>

<llo_original>
// kernel: forward.1
$region0: #{forward.1}
  #allocation0 [shape = 'u32[]', space=smem, size = 0x4, offset = 0x4, fixed_abs, tag = 'smem constant byte address 0x4 - core index']
  #allocation1 [shape = 'u32[72,128]{1,0:T(1,128)}', space=vmem, size = 0x9000, scoped, tag = 'internal scratch']
  %s0 = inlined_call_operand.vmem [shape: s32[2,3], index: 0, kind: input, shape index: {}]
  %s1 = inlined_call_operand.vmem [shape: f32[8,8], index: 1, kind: input, shape index: {}]
  %s2 = inlined_call_operand.vmem [shape: f32[8,2], index: 2, kind: input, shape index: {}]
  %s3 = inlined_call_operand.vmem [shape: f32[3,16], index: 3, kind: input, shape index: {}]
  %s4 = inlined_call_operand.vmem [shape: f32[17,32], index: 4, kind: input, shape index: {}]
  %s5 = inlined_call_operand.vmem [shape: f32[10,32], index: 5, kind: input, shape index: {}]
  %s6 = inlined_call_operand.vmem [shape: f32[20,8], index: 6, kind: input, shape index: {}]
  %s7 = inlined_call_operand.vmem [shape: f32[138,384], index: 7, kind: input, shape index: {}]
  %s8 = inlined_call_operand.vmem [shape: f32[2,16], index: 8, kind: input, shape index: {}]
  %s9 = inlined_call_operand.vmem [shape: f32[369,512], index: 9, kind: input, shape index: {}]
  %s10 = inlined_call_operand.vmem [shape: f32[513,256], index: 10, kind: input, shape index: {}]
  %s11 = inlined_call_operand.vmem [shape: f32[257,64], index: 11, kind: input, shape index: {}]
  %s12 = inlined_call_operand.vmem [shape: f32[65,2], index: 12, kind: input, shape index: {}]
  %s13 = inlined_call_operand.hbm [shape: f32[2,2], index: 13, kind: output, shape index: {}]
  %s14 = sld [smem:[#allocation0]]
  $region62: #{forward.1} parent=0
    _
  %s16 = ssub.s32 1, %s14
  %s17 = scalar_select 0, %s16, %s14
  $region1: #{forward.1} parent=0
    #allocation2 [shape = 'u8[1024]{0}', space=vmem, size = 0x400, scoped, tag = 'output window, operand 0, single buffered']
    #allocation3 [shape = 's32[1]{0}', space=sflag, size = 0x4, scoped, tag = 'scoped memory for forward.1']
    %18 = vsyncpa [#allocation3], 0
    // Predicated region
    $region2: #{forward.1} parent=1 // pred_check
      _
    $region3: #{forward.1} parent=1 // pred_check_branch
      %20 = sbr.rel (0) target = $region5
    $region4: #{forward.1} parent=1 // pred_region
      _
    $region5: #{forward.1} parent=1 // pred_fallthru
      _
    // Predicated region
    $region6: #{forward.1} parent=1 // pred_check
      _
    $region7: #{forward.1} parent=1 // pred_check_branch
      %22 = sbr.rel (0) target = $region9
    $region8: #{forward.1} parent=1 // pred_region
      _
    $region9: #{forward.1} parent=1 // pred_fallthru
      _
    // Predicated region
    $region10: #{forward.1} parent=1 // pred_check
      _
    $region11: #{forward.1} parent=1 // pred_check_branch
      %24 = sbr.rel (0) target = $region13
    $region12: #{forward.1} parent=1 // pred_region
      _
    $region13: #{forward.1} parent=1 // pred_fallthru
      _
    // Predicated region
    $region14: #{forward.1} parent=1 // pred_check
      _
    $region15: #{forward.1} parent=1 // pred_check_branch
      %26 = sbr.rel (0) target = $region17
    $region16: #{forward.1} parent=1 // pred_region
      _
    $region17: #{forward.1} parent=1 // pred_fallthru
      _
    // Predicated region
    $region18: #{forward.1} parent=1 // pred_check
      _
    $region19: #{forward.1} parent=1 // pred_check_branch
      %28 = sbr.rel (0) target = $region21
    $region20: #{forward.1} parent=1 // pred_region
      _
    $region21: #{forward.1} parent=1 // pred_fallthru
      _
    // Predicated region
    $region22: #{forward.1} parent=1 // pred_check
      _
    $region23: #{forward.1} parent=1 // pred_check_branch
      %30 = sbr.rel (0) target = $region25
    $region24: #{forward.1} parent=1 // pred_region
      _
    $region25: #{forward.1} parent=1 // pred_fallthru
      _
    // Predicated region
    $region26: #{forward.1} parent=1 // pred_check
      _
    $region27: #{forward.1} parent=1 // pred_check_branch
      %32 = sbr.rel (0) target = $region29
    $region28: #{forward.1} parent=1 // pred_region
      _
    $region29: #{forward.1} parent=1 // pred_fallthru
      _
    // Predicated region
    $region30: #{forward.1} parent=1 // pred_check
      _
    $region31: #{forward.1} parent=1 // pred_check_branch
      %34 = sbr.rel (0) target = $region33
    $region32: #{forward.1} parent=1 // pred_region
      _
    $region33: #{forward.1} parent=1 // pred_fallthru
      _
    // Predicated region
    $region34: #{forward.1} parent=1 // pred_check
      _
    $region35: #{forward.1} parent=1 // pred_check_branch
      %36 = sbr.rel (0) target = $region37
    $region36: #{forward.1} parent=1 // pred_region
      _
    $region37: #{forward.1} parent=1 // pred_fallthru
      _
    // Predicated region
    $region38: #{forward.1} parent=1 // pred_check
      _
    $region39: #{forward.1} parent=1 // pred_check_branch
      %38 = sbr.rel (0) target = $region41
    $region40: #{forward.1} parent=1 // pred_region
      _
    $region41: #{forward.1} parent=1 // pred_fallthru
      _
    // Predicated region
    $region42: #{forward.1} parent=1 // pred_check
      _
    $region43: #{forward.1} parent=1 // pred_check_branch
      %40 = sbr.rel (0) target = $region45
    $region44: #{forward.1} parent=1 // pred_region
      _
    $region45: #{forward.1} parent=1 // pred_fallthru
      _
    // Predicated region
    $region46: #{forward.1} parent=1 // pred_check
      _
    $region47: #{forward.1} parent=1 // pred_check_branch
      %42 = sbr.rel (0) target = $region49
    $region48: #{forward.1} parent=1 // pred_region
      _
    $region49: #{forward.1} parent=1 // pred_fallthru
      _
    // Predicated region
    $region50: #{forward.1} parent=1 // pred_check
      _
    $region51: #{forward.1} parent=1 // pred_check_branch
      %44 = sbr.rel (0) target = $region53
    $region52: #{forward.1} parent=1 // pred_region
      _
    $region53: #{forward.1} parent=1 // pred_fallthru
      _
    %v45 = vld [vmem:[%s1] sm:$0xff]
    %v46 = vld [vmem:[%s2] sm:$0xff]
    %v47 = vld [vmem:[%s3] sm:$0x3]
    %vm48 = vcmask 15360
    %v50 = vsel %vm48, %v46, 0
    %vm52 = vcmask 1041408
    %v54 = vsel %vm52, %v47, 0
    %56 = vmatpush.msra.mxu0 0.0
    %57 = vmatpush.msra.mxu0 0.0
    %58 = vmatpush.msra.mxu0 0.0
    %59 = vmatpush.msra.mxu0 0.0
    %60 = vmatpush.msra.mxu0 0.0
    %61 = vmatpush.msra.mxu0 0.0
    %62 = vmatpush.msra.mxu0 0.0
    %63 = vmatpush.msra.mxu0 0.0
    %64 = vmatpush.msra.mxu0 0.0
    %65 = vmatpush.msra.mxu0 0.0
    %66 = vmatpush.msra.mxu0 0.0
    %67 = vmatpush.msra.mxu0 0.0
    %68 = vmatpush.msra.mxu0 0.0
    %69 = vmatpush.msra.mxu0 0.0
    %70 = vmatpush.msra.mxu0 0.0
    %71 = vmatpush.msra.mxu0 %v54
    %72 = vmatmul.f32.gmra.mxu0 %v50
    %v73 = vpop.f32.mrf.mxu0
    %v74 = vadd.f32 0.0, %v73
    %75 = vdwg.mxu0
    %v76 = vld [vmem:[%s3 + $0x2] sm:$0x1]
    %v77 = vperm.slane %v76, 0
    %vm78 = vcmask 64512
    %v80 = vsel %vm78, %v45, 0
    %82 = vmatpush.msra.mxu0 0.0
    %83 = vmatpush.msra.mxu0 0.0
    %84 = vmatpush.msra.mxu0 0.0
    %85 = vmatpush.msra.mxu0 0.0
    %86 = vmatpush.msra.mxu0 0.0
    %87 = vmatpush.msra.mxu0 0.0
    %88 = vmatpush.msra.mxu0 0.0
    %89 = vmatpush.msra.mxu0 0.0
    %90 = vmatpush.msra.mxu0 0.0
    %91 = vmatpush.msra.mxu0 0.0
    %92 = vmatpush.msra.mxu0 0.0
    %93 = vmatpush.msra.mxu0 0.0
    %94 = vmatpush.msra.mxu0 0.0
    %95 = vmatpush.msra.mxu0 0.0
    %96 = vmatpush.msra.mxu0 0.0
    %97 = vmatpush.msra.mxu0 %v74
    %98 = vmatmul.f32.gmra.mxu0 %v80
    %v99 = vpop.f32.mrf.mxu0
    %v100 = vadd.f32 %v77, %v99
    %101 = vdwg.mxu0
    %v102 = vmax.f32 %v100, 0.0
    %v103 = vld [vmem:[%s4] sm:$0xff]
    %v104 = vld [vmem:[%s4 + $0x8] sm:$0xff]
    %vm105 = vcmask 130048
    %v107 = vsel %vm105, %v102, 0
    %109 = vmatpush.msra.mxu0 0.0
    %110 = vmatpush.msra.mxu0 0.0
    %111 = vmatpush.msra.mxu0 0.0
    %112 = vmatpush.msra.mxu0 0.0
    %113 = vmatpush.msra.mxu0 0.0
    %114 = vmatpush.msra.mxu0 0.0
    %115 = vmatpush.msra.mxu0 0.0
    %116 = vmatpush.msra.mxu0 0.0
    %117 = vmatpush.msra.mxu0 0.0
    %118 = vmatpush.msra.mxu0 0.0
    %119 = vmatpush.msra.mxu0 0.0
    %120 = vmatpush.msra.mxu0 0.0
    %121 = vmatpush.msra.mxu0 0.0
    %122 = vmatpush.msra.mxu0 0.0
    %123 = vmatpush.msra.mxu0 %v104
    %124 = vmatpush.msra.mxu0 %v103
    %125 = vmatmul.f32.gmra.mxu0 %v107
    %v126 = vpop.f32.mrf.mxu0
    %v127 = vadd.f32 0.0, %v126
    %128 = vdwg.mxu0
    %v129 = vld [vmem:[%s4 + $0x10] sm:$0x1]
    %v130 = vperm.slane %v129, 0
    %131 = vmatpush.msra.mxu0 0.0
    %132 = vmatpush.msra.mxu0 0.0
    %133 = vmatpush.msra.mxu0 0.0
    %134 = vmatpush.msra.mxu0 0.0
    %135 = vmatpush.msra.mxu0 0.0
    %136 = vmatpush.msra.mxu0 0.0
    %137 = vmatpush.msra.mxu0 0.0
    %138 = vmatpush.msra.mxu0 0.0
    %139 = vmatpush.msra.mxu0 0.0
    %140 = vmatpush.msra.mxu0 0.0
    %141 = vmatpush.msra.mxu0 0.0
    %142 = vmatpush.msra.mxu0 0.0
    %143 = vmatpush.msra.mxu0 0.0
    %144 = vmatpush.msra.mxu0 0.0
    %145 = vmatpush.msra.mxu0 0.0
    %146 = vmatpush.msra.mxu0 %v127
    %147 = vmatmul.f32.gmra.mxu0 %v80
    %v148 = vpop.f32.mrf.mxu0
    %v149 = vadd.f32 %v130, %v148
    %150 = vdwg.mxu0
    %v151 = vmax.f32 %v149, 0.0
    %v152 = vld [vmem:[%s7] sm:$0xff]
    %v153 = vld [vmem:[%s7 + $0x8] sm:$0xff]
    %v154 = vld [vmem:[%s7 + $0x10] sm:$0xff]
    %v155 = vld [vmem:[%s7 + $0x18] sm:$0xff]
    %v156 = vld [vmem:[%s7 + $0x20] sm:$0xff]
    %v157 = vld [vmem:[%s7 + $0x28] sm:$0xff]
    %v158 = vld [vmem:[%s7 + $0x30] sm:$0xff]
    %v159 = vld [vmem:[%s7 + $0x38] sm:$0xff]
    %v160 = vld [vmem:[%s7 + $0x40] sm:$0xff]
    %v161 = vld [vmem:[%s7 + $0x48] sm:$0xff]
    %v162 = vld [vmem:[%s7 + $0x50] sm:$0xff]
    %v163 = vld [vmem:[%s7 + $0x58] sm:$0xff]
    %v164 = vld [vmem:[%s7 + $0x60] sm:$0xff]
    %v165 = vld [vmem:[%s7 + $0x68] sm:$0xff]
    %v166 = vld [vmem:[%s7 + $0x70] sm:$0xff]
    %v167 = vld [vmem:[%s7 + $0x78] sm:$0xff]
    %v168 = vld [vmem:[%s7 + $0x80] sm:$0xff]
    %v169 = vld [vmem:[%s7 + $0x88] sm:$0xff]
    %v170 = vld [vmem:[%s7 + $0x90] sm:$0xff]
    %v171 = vld [vmem:[%s7 + $0x98] sm:$0xff]
    %v172 = vld [vmem:[%s7 + $0xa0] sm:$0xff]
    %v173 = vld [vmem:[%s7 + $0xa8] sm:$0xff]
    %v174 = vld [vmem:[%s7 + $0xb0] sm:$0xff]
    %v175 = vld [vmem:[%s7 + $0xb8] sm:$0xff]
    %v176 = vld [vmem:[%s7 + $0xc0] sm:$0xff]
    %v177 = vld [vmem:[%s7 + $0xc8] sm:$0xff]
    %v178 = vld [vmem:[%s7 + $0xd0] sm:$0xff]
    %v179 = vld [vmem:[%s7 + $0xd8] sm:$0xff]
    %v180 = vld [vmem:[%s7 + $0xe0] sm:$0xff]
    %v181 = vld [vmem:[%s7 + $0xe8] sm:$0xff]
    %v182 = vld [vmem:[%s7 + $0xf0] sm:$0xff]
    %v183 = vld [vmem:[%s7 + $0xf8] sm:$0xff]
    %v184 = vld [vmem:[%s7 + $0x100] sm:$0xff]
    %v185 = vld [vmem:[%s7 + $0x108] sm:$0xff]
    %v186 = vld [vmem:[%s7 + $0x110] sm:$0xff]
    %v187 = vld [vmem:[%s7 + $0x118] sm:$0xff]
    %v188 = vld [vmem:[%s7 + $0x120] sm:$0xff]
    %v189 = vld [vmem:[%s7 + $0x128] sm:$0xff]
    %v190 = vld [vmem:[%s7 + $0x130] sm:$0xff]
    %v191 = vld [vmem:[%s7 + $0x138] sm:$0xff]
    %v192 = vld [vmem:[%s7 + $0x140] sm:$0xff]
    %v193 = vld [vmem:[%s7 + $0x148] sm:$0xff]
    %v194 = vld [vmem:[%s7 + $0x150] sm:$0xff]
    %v195 = vld [vmem:[%s7 + $0x158] sm:$0xff]
    %v196 = vld [vmem:[%s7 + $0x160] sm:$0xff]
    %v197 = vld [vmem:[%s7 + $0x168] sm:$0xff]
    %v198 = vld [vmem:[%s7 + $0x170] sm:$0xff]
    %v199 = vld [vmem:[%s7 + $0x178] sm:$0xff]
    %v200 = vld [vmem:[%s7 + $0x180] sm:$0xff]
    %v201 = vld [vmem:[%s7 + $0x188] sm:$0xff]
    %v202 = vld [vmem:[%s7 + $0x190] sm:$0xff]
    %s203 = scalar_lea.vmem %s7, 408
    %v204 = vld [vmem:[%s203] ss:$8 sm:$0x7]
    %s205 = scalar_lea.vmem %s7, 409
    %v206 = vld [vmem:[%s205] ss:$8 sm:$0x7]
    %v207 = vld [vmem:[%s6] sm:$0xff]
    %v208 = vld [vmem:[%s6 + $0x8] sm:$0xff]
    %v209 = vld [vmem:[%s6 + $0x10] sm:$0xf]
    %v211 = vperm.slane %v204, 0
    %v212 = vperm.slane %v204, 1
    %v213 = vperm.slane %v204, 2
    %v218 = vsel %vm78, %v207, 0
    %v221 = vsel %vm78, %v208, 0
    %v224 = vsel %vm78, %v209, 0
    %226 = vmatpush.msra.mxu0 0.0
    %227 = vmatpush.msra.mxu0 0.0
    %228 = vmatpush.msra.mxu0 0.0
    %229 = vmatpush.msra.mxu0 0.0
    %230 = vmatpush.msra.mxu0 0.0
    %231 = vmatpush.msra.mxu0 0.0
    %232 = vmatpush.msra.mxu0 0.0
    %233 = vmatpush.msra.mxu0 0.0
    %234 = vmatpush.msra.mxu0 0.0
    %235 = vmatpush.msra.mxu0 0.0
    %236 = vmatpush.msra.mxu0 0.0
    %237 = vmatpush.msra.mxu0 0.0
    %238 = vmatpush.msra.mxu0 0.0
    %239 = vmatpush.msra.mxu0 0.0
    %240 = vmatpush.msra.mxu0 0.0
    %241 = vmatpush.msra.mxu0 %v200
    %242 = vmatmul.f32.gmra.mxu0 %v218
    %v243 = vpop.f32.mrf.mxu0
    %v244 = vadd.f32 %v211, %v243
    %245 = vmatmul.f32.gmra.mxu0 %v221
    %v246 = vpop.f32.mrf.mxu0
    %v247 = vadd.f32 %v211, %v246
    %248 = vmatmul.f32.gmra.mxu0 %v224
    %v249 = vpop.f32.mrf.mxu0
    %v250 = vadd.f32 %v211, %v249
    %251 = vdwg.mxu0
    %252 = vmatpush.msra.mxu0 0.0
    %253 = vmatpush.msra.mxu0 0.0
    %254 = vmatpush.msra.mxu0 0.0
    %255 = vmatpush.msra.mxu0 0.0
    %256 = vmatpush.msra.mxu0 0.0
    %257 = vmatpush.msra.mxu0 0.0
    %258 = vmatpush.msra.mxu0 0.0
    %259 = vmatpush.msra.mxu0 0.0
    %260 = vmatpush.msra.mxu0 0.0
    %261 = vmatpush.msra.mxu0 0.0
    %262 = vmatpush.msra.mxu0 0.0
    %263 = vmatpush.msra.mxu0 0.0
    %264 = vmatpush.msra.mxu0 0.0
    %265 = vmatpush.msra.mxu0 0.0
    %266 = vmatpush.msra.mxu0 0.0
    %267 = vmatpush.msra.mxu0 %v201
    %268 = vmatmul.f32.gmra.mxu0 %v218
    %v269 = vpop.f32.mrf.mxu0
    %v270 = vadd.f32 %v212, %v269
    %271 = vmatmul.f32.gmra.mxu0 %v221
    %v272 = vpop.f32.mrf.mxu0
    %v273 = vadd.f32 %v212, %v272
    %274 = vmatmul.f32.gmra.mxu0 %v224
    %v275 = vpop.f32.mrf.mxu0
    %v276 = vadd.f32 %v212, %v275
    %277 = vdwg.mxu0
    %278 = vmatpush.msra.mxu0 0.0
    %279 = vmatpush.msra.mxu0 0.0
    %280 = vmatpush.msra.mxu0 0.0
    %281 = vmatpush.msra.mxu0 0.0
    %282 = vmatpush.msra.mxu0 0.0
    %283 = vmatpush.msra.mxu0 0.0
    %284 = vmatpush.msra.mxu0 0.0
    %285 = vmatpush.msra.mxu0 0.0
    %286 = vmatpush.msra.mxu0 0.0
    %287 = vmatpush.msra.mxu0 0.0
    %288 = vmatpush.msra.mxu0 0.0
    %289 = vmatpush.msra.mxu0 0.0
    %290 = vmatpush.msra.mxu0 0.0
    %291 = vmatpush.msra.mxu0 0.0
    %292 = vmatpush.msra.mxu0 0.0
    %293 = vmatpush.msra.mxu0 %v202
    %294 = vmatmul.f32.gmra.mxu0 %v218
    %v295 = vpop.f32.mrf.mxu0
    %v296 = vadd.f32 %v213, %v295
    %297 = vmatmul.f32.gmra.mxu0 %v221
    %v298 = vpop.f32.mrf.mxu0
    %v299 = vadd.f32 %v213, %v298
    %300 = vmatmul.f32.gmra.mxu0 %v224
    %v301 = vpop.f32.mrf.mxu0
    %v302 = vadd.f32 %v213, %v301
    %303 = vdwg.mxu0
    %v305 = vperm.slane %v206, 0
    %v306 = vperm.slane %v206, 1
    %v307 = vperm.slane %v206, 2
    %311 = vmatpush.msra.mxu0 %v197
    %312 = vmatpush.msra.mxu0 %v194
    %313 = vmatpush.msra.mxu0 %v191
    %314 = vmatpush.msra.mxu0 %v188
    %315 = vmatpush.msra.mxu0 %v185
    %316 = vmatpush.msra.mxu0 %v182
    %317 = vmatpush.msra.mxu0 %v179
    %318 = vmatpush.msra.mxu0 %v176
    %319 = vmatpush.msra.mxu0 %v173
    %320 = vmatpush.msra.mxu0 %v170
    %321 = vmatpush.msra.mxu0 %v167
    %322 = vmatpush.msra.mxu0 %v164
    %323 = vmatpush.msra.mxu0 %v161
    %324 = vmatpush.msra.mxu0 %v158
    %325 = vmatpush.msra.mxu0 %v155
    %326 = vmatpush.msra.mxu0 %v152
    %327 = vmatmul.f32.gmra.mxu0 0.0
    %v328 = vpop.f32.mrf.mxu0
    %v329 = vadd.f32 %v305, %v328
    %330 = vdwg.mxu0
    %331 = vmatpush.msra.mxu0 %v198
    %332 = vmatpush.msra.mxu0 %v195
    %333 = vmatpush.msra.mxu0 %v192
    %334 = vmatpush.msra.mxu0 %v189
    %335 = vmatpush.msra.mxu0 %v186
    %336 = vmatpush.msra.mxu0 %v183
    %337 = vmatpush.msra.mxu0 %v180
    %338 = vmatpush.msra.mxu0 %v177
    %339 = vmatpush.msra.mxu0 %v174
    %340 = vmatpush.msra.mxu0 %v171
    %341 = vmatpush.msra.mxu0 %v168
    %342 = vmatpush.msra.mxu0 %v165
    %343 = vmatpush.msra.mxu0 %v162
    %344 = vmatpush.msra.mxu0 %v159
    %345 = vmatpush.msra.mxu0 %v156
    %346 = vmatpush.msra.mxu0 %v153
    %347 = vmatmul.f32.gmra.mxu0 0.0
    %v348 = vpop.f32.mrf.mxu0
    %v349 = vadd.f32 %v306, %v348
    %350 = vdwg.mxu0
    %351 = vmatpush.msra.mxu0 %v199
    %352 = vmatpush.msra.mxu0 %v196
    %353 = vmatpush.msra.mxu0 %v193
    %354 = vmatpush.msra.mxu0 %v190
    %355 = vmatpush.msra.mxu0 %v187
    %356 = vmatpush.msra.mxu0 %v184
    %357 = vmatpush.msra.mxu0 %v181
    %358 = vmatpush.msra.mxu0 %v178
    %359 = vmatpush.msra.mxu0 %v175
    %360 = vmatpush.msra.mxu0 %v172
    %361 = vmatpush.msra.mxu0 %v169
    %362 = vmatpush.msra.mxu0 %v166
    %363 = vmatpush.msra.mxu0 %v163
    %364 = vmatpush.msra.mxu0 %v160
    %365 = vmatpush.msra.mxu0 %v157
    %366 = vmatpush.msra.mxu0 %v154
    %367 = vmatmul.f32.gmra.mxu0 0.0
    %v368 = vpop.f32.mrf.mxu0
    %v369 = vadd.f32 %v307, %v368
    %370 = vdwg.mxu0
    %v371 = vadd.f32 %v244, %v329
    %v372 = vxor.u32 %v371, 2147483648
    %v373 = vmul.f32 %v372, 1.442695
    %v374 = vpow.pop %v373
    %v375 = vadd.f32 %v374, 1.0
    %v376 = vrcp.pop %v375
    %v377 = vmul.f32 %v375, %v376
    %v378 = vsub.f32 1.0, %v377
    %v379 = vmul.f32 %v376, %v378
    %v380 = vadd.f32 %v376, %v379
    %vm381 = vweird.f32 %v375
    %vm382 = vweird.f32 %v376
    %vm383 = vmor %vm381, %vm382
    %v384 = vsel %vm383, %v376, %v380
    %v385 = vand.u32 2147483647, %v375
    %vm386 = vcmp.eq.f32.partialorder %v385, 8.507059e+37
    %v387 = vand.u32 %v375, 2147483648
    %v388 = vor.u32 1.1754944e-38, %v387
    %v389 = vsel %vm386, %v388, %v384
    %v390 = vmul.f32 1.0, %v389
    %v391 = vadd.f32 %v270, %v349
    %v392 = vxor.u32 %v391, 2147483648
    %v393 = vmul.f32 %v392, 1.442695
    %v394 = vpow.pop %v393
    %v395 = vadd.f32 %v394, 1.0
    %v396 = vrcp.pop %v395
    %v397 = vmul.f32 %v395, %v396
    %v398 = vsub.f32 1.0, %v397
    %v399 = vmul.f32 %v396, %v398
    %v400 = vadd.f32 %v396, %v399
    %vm401 = vweird.f32 %v395
    %vm402 = vweird.f32 %v396
    %vm403 = vmor %vm401, %vm402
    %v404 = vsel %vm403, %v396, %v400
    %v405 = vand.u32 2147483647, %v395
    %vm406 = vcmp.eq.f32.partialorder %v405, 8.507059e+37
    %v407 = vand.u32 %v395, 2147483648
    %v408 = vor.u32 1.1754944e-38, %v407
    %v409 = vsel %vm406, %v408, %v404
    %v410 = vmul.f32 1.0, %v409
    %v411 = vmul.f32 %v390, %v369
    %v412 = vadd.f32 %v296, %v411
    %v413 = vtanh.pop %v412
    %v414 = vsub.f32 1.0, %v410
    %v415 = vmul.f32 %v414, %v413
    %v416 = vmul.f32 %v410, 0.0
    %v417 = vadd.f32 %v415, %v416
    %418 = vmatpush.msra.mxu0 %v197
    %419 = vmatpush.msra.mxu0 %v194
    %420 = vmatpush.msra.mxu0 %v191
    %421 = vmatpush.msra.mxu0 %v188
    %422 = vmatpush.msra.mxu0 %v185
    %423 = vmatpush.msra.mxu0 %v182
    %424 = vmatpush.msra.mxu0 %v179
    %425 = vmatpush.msra.mxu0 %v176
    %426 = vmatpush.msra.mxu0 %v173
    %427 = vmatpush.msra.mxu0 %v170
    %428 = vmatpush.msra.mxu0 %v167
    %429 = vmatpush.msra.mxu0 %v164
    %430 = vmatpush.msra.mxu0 %v161
    %431 = vmatpush.msra.mxu0 %v158
    %432 = vmatpush.msra.mxu0 %v155
    %433 = vmatpush.msra.mxu0 %v152
    %434 = vmatmul.f32.gmra.mxu0 %v417
    %v435 = vpop.f32.mrf.mxu0
    %v436 = vadd.f32 %v305, %v435
    %437 = vdwg.mxu0
    %438 = vmatpush.msra.mxu0 %v198
    %439 = vmatpush.msra.mxu0 %v195
    %440 = vmatpush.msra.mxu0 %v192
    %441 = vmatpush.msra.mxu0 %v189
    %442 = vmatpush.msra.mxu0 %v186
    %443 = vmatpush.msra.mxu0 %v183
    %444 = vmatpush.msra.mxu0 %v180
    %445 = vmatpush.msra.mxu0 %v177
    %446 = vmatpush.msra.mxu0 %v174
    %447 = vmatpush.msra.mxu0 %v171
    %448 = vmatpush.msra.mxu0 %v168
    %449 = vmatpush.msra.mxu0 %v165
    %450 = vmatpush.msra.mxu0 %v162
    %451 = vmatpush.msra.mxu0 %v159
    %452 = vmatpush.msra.mxu0 %v156
    %453 = vmatpush.msra.mxu0 %v153
    %454 = vmatmul.f32.gmra.mxu0 %v417
    %v455 = vpop.f32.mrf.mxu0
    %v456 = vadd.f32 %v306, %v455
    %457 = vdwg.mxu0
    %458 = vmatpush.msra.mxu0 %v199
    %459 = vmatpush.msra.mxu0 %v196
    %460 = vmatpush.msra.mxu0 %v193
    %461 = vmatpush.msra.mxu0 %v190
    %462 = vmatpush.msra.mxu0 %v187
    %463 = vmatpush.msra.mxu0 %v184
    %464 = vmatpush.msra.mxu0 %v181
    %465 = vmatpush.msra.mxu0 %v178
    %466 = vmatpush.msra.mxu0 %v175
    %467 = vmatpush.msra.mxu0 %v172
    %468 = vmatpush.msra.mxu0 %v169
    %469 = vmatpush.msra.mxu0 %v166
    %470 = vmatpush.msra.mxu0 %v163
    %471 = vmatpush.msra.mxu0 %v160
    %472 = vmatpush.msra.mxu0 %v157
    %473 = vmatpush.msra.mxu0 %v154
    %474 = vmatmul.f32.gmra.mxu0 %v417
    %v475 = vpop.f32.mrf.mxu0
    %v476 = vadd.f32 %v307, %v475
    %477 = vdwg.mxu0
    %v479 = vrot.slane %v436, 4
    %v481 = vadd.f32 %v244, %v479
    %v482 = vxor.u32 %v481, 2147483648
    %v483 = vmul.f32 %v482, 1.442695
    %v484 = vpow.pop %v483
    %v485 = vadd.f32 %v484, 1.0
    %v486 = vrcp.pop %v485
    %v487 = vmul.f32 %v485, %v486
    %v488 = vsub.f32 1.0, %v487
    %v489 = vmul.f32 %v486, %v488
    %v490 = vadd.f32 %v486, %v489
    %vm491 = vweird.f32 %v485
    %vm492 = vweird.f32 %v486
    %vm493 = vmor %vm491, %vm492
    %v494 = vsel %vm493, %v486, %v490
    %v495 = vand.u32 2147483647, %v485
    %vm496 = vcmp.eq.f32.partialorder %v495, 8.507059e+37
    %v497 = vand.u32 %v485, 2147483648
    %v498 = vor.u32 1.1754944e-38, %v497
    %v499 = vsel %vm496, %v498, %v494
    %v500 = vmul.f32 1.0, %v499
    %v502 = vrot.slane %v456, 4
    %v504 = vadd.f32 %v270, %v502
    %v505 = vxor.u32 %v504, 2147483648
    %v506 = vmul.f32 %v505, 1.442695
    %v507 = vpow.pop %v506
    %v508 = vadd.f32 %v507, 1.0
    %v509 = vrcp.pop %v508
    %v510 = vmul.f32 %v508, %v509
    %v511 = vsub.f32 1.0, %v510
    %v512 = vmul.f32 %v509, %v511
    %v513 = vadd.f32 %v509, %v512
    %vm514 = vweird.f32 %v508
    %vm515 = vweird.f32 %v509
    %vm516 = vmor %vm514, %vm515
    %v517 = vsel %vm516, %v509, %v513
    %v518 = vand.u32 2147483647, %v508
    %vm519 = vcmp.eq.f32.partialorder %v518, 8.507059e+37
    %v520 = vand.u32 %v508, 2147483648
    %v521 = vor.u32 1.1754944e-38, %v520
    %v522 = vsel %vm519, %v521, %v517
    %v523 = vmul.f32 1.0, %v522
    %v525 = vrot.slane %v476, 4
    %v527 = vmul.f32 %v500, %v525
    %v528 = vadd.f32 %v296, %v527
    %v529 = vtanh.pop %v528
    %v530 = vsub.f32 1.0, %v523
    %v531 = vmul.f32 %v530, %v529
    %v533 = vrot.slane %v417, 4
    %v535 = vmul.f32 %v523, %v533
    %v536 = vadd.f32 %v531, %v535
    %v538 = vrot.slane %v536, 4
    %540 = vmatpush.msra.mxu0 %v197
    %541 = vmatpush.msra.mxu0 %v194
    %542 = vmatpush.msra.mxu0 %v191
    %543 = vmatpush.msra.mxu0 %v188
    %544 = vmatpush.msra.mxu0 %v185
    %545 = vmatpush.msra.mxu0 %v182
    %546 = vmatpush.msra.mxu0 %v179
    %547 = vmatpush.msra.mxu0 %v176
    %548 = vmatpush.msra.mxu0 %v173
    %549 = vmatpush.msra.mxu0 %v170
    %550 = vmatpush.msra.mxu0 %v167
    %551 = vmatpush.msra.mxu0 %v164
    %552 = vmatpush.msra.mxu0 %v161
    %553 = vmatpush.msra.mxu0 %v158
    %554 = vmatpush.msra.mxu0 %v155
    %555 = vmatpush.msra.mxu0 %v152
    %556 = vmatmul.f32.gmra.mxu0 %v538
    %v557 = vpop.f32.mrf.mxu0
    %v558 = vadd.f32 %v305, %v557
    %559 = vdwg.mxu0
    %560 = vmatpush.msra.mxu0 %v198
    %561 = vmatpush.msra.mxu0 %v195
    %562 = vmatpush.msra.mxu0 %v192
    %563 = vmatpush.msra.mxu0 %v189
    %564 = vmatpush.msra.mxu0 %v186
    %565 = vmatpush.msra.mxu0 %v183
    %566 = vmatpush.msra.mxu0 %v180
    %567 = vmatpush.msra.mxu0 %v177
    %568 = vmatpush.msra.mxu0 %v174
    %569 = vmatpush.msra.mxu0 %v171
    %570 = vmatpush.msra.mxu0 %v168
    %571 = vmatpush.msra.mxu0 %v165
    %572 = vmatpush.msra.mxu0 %v162
    %573 = vmatpush.msra.mxu0 %v159
    %574 = vmatpush.msra.mxu0 %v156
    %575 = vmatpush.msra.mxu0 %v153
    %576 = vmatmul.f32.gmra.mxu0 %v538
    %v577 = vpop.f32.mrf.mxu0
    %v578 = vadd.f32 %v306, %v577
    %579 = vdwg.mxu0
    %580 = vmatpush.msra.mxu0 %v199
    %581 = vmatpush.msra.mxu0 %v196
    %582 = vmatpush.msra.mxu0 %v193
    %583 = vmatpush.msra.mxu0 %v190
    %584 = vmatpush.msra.mxu0 %v187
    %585 = vmatpush.msra.mxu0 %v184
    %586 = vmatpush.msra.mxu0 %v181
    %587 = vmatpush.msra.mxu0 %v178
    %588 = vmatpush.msra.mxu0 %v175
    %589 = vmatpush.msra.mxu0 %v172
    %590 = vmatpush.msra.mxu0 %v169
    %591 = vmatpush.msra.mxu0 %v166
    %592 = vmatpush.msra.mxu0 %v163
    %593 = vmatpush.msra.mxu0 %v160
    %594 = vmatpush.msra.mxu0 %v157
    %595 = vmatpush.msra.mxu0 %v154
    %596 = vmatmul.f32.gmra.mxu0 %v538
    %v597 = vpop.f32.mrf.mxu0
    %v598 = vadd.f32 %v307, %v597
    %599 = vdwg.mxu0
    %v600 = vadd.f32 %v247, %v558
    %v601 = vxor.u32 %v600, 2147483648
    %v602 = vmul.f32 %v601, 1.442695
    %v603 = vpow.pop %v602
    %v604 = vadd.f32 %v603, 1.0
    %v605 = vrcp.pop %v604
    %v606 = vmul.f32 %v604, %v605
    %v607 = vsub.f32 1.0, %v606
    %v608 = vmul.f32 %v605, %v607
    %v609 = vadd.f32 %v605, %v608
    %vm610 = vweird.f32 %v604
    %vm611 = vweird.f32 %v605
    %vm612 = vmor %vm610, %vm611
    %v613 = vsel %vm612, %v605, %v609
    %v614 = vand.u32 2147483647, %v604
    %vm615 = vcmp.eq.f32.partialorder %v614, 8.507059e+37
    %v616 = vand.u32 %v604, 2147483648
    %v617 = vor.u32 1.1754944e-38, %v616
    %v618 = vsel %vm615, %v617, %v613
    %v619 = vmul.f32 1.0, %v618
    %v620 = vadd.f32 %v273, %v578
    %v621 = vxor.u32 %v620, 2147483648
    %v622 = vmul.f32 %v621, 1.442695
    %v623 = vpow.pop %v622
    %v624 = vadd.f32 %v623, 1.0
    %v625 = vrcp.pop %v624
    %v626 = vmul.f32 %v624, %v625
    %v627 = vsub.f32 1.0, %v626
    %v628 = vmul.f32 %v625, %v627
    %v629 = vadd.f32 %v625, %v628
    %vm630 = vweird.f32 %v624
    %vm631 = vweird.f32 %v625
    %vm632 = vmor %vm630, %vm631
    %v633 = vsel %vm632, %v625, %v629
    %v634 = vand.u32 2147483647, %v624
    %vm635 = vcmp.eq.f32.partialorder %v634, 8.507059e+37
    %v636 = vand.u32 %v624, 2147483648
    %v637 = vor.u32 1.1754944e-38, %v636
    %v638 = vsel %vm635, %v637, %v633
    %v639 = vmul.f32 1.0, %v638
    %v640 = vmul.f32 %v619, %v598
    %v641 = vadd.f32 %v299, %v640
    %v642 = vtanh.pop %v641
    %v643 = vsub.f32 1.0, %v639
    %v644 = vmul.f32 %v643, %v642
    %v645 = vmul.f32 %v639, %v538
    %v646 = vadd.f32 %v644, %v645
    %647 = vmatpush.msra.mxu0 %v197
    %648 = vmatpush.msra.mxu0 %v194
    %649 = vmatpush.msra.mxu0 %v191
    %650 = vmatpush.msra.mxu0 %v188
    %651 = vmatpush.msra.mxu0 %v185
    %652 = vmatpush.msra.mxu0 %v182
    %653 = vmatpush.msra.mxu0 %v179
    %654 = vmatpush.msra.mxu0 %v176
    %655 = vmatpush.msra.mxu0 %v173
    %656 = vmatpush.msra.mxu0 %v170
    %657 = vmatpush.msra.mxu0 %v167
    %658 = vmatpush.msra.mxu0 %v164
    %659 = vmatpush.msra.mxu0 %v161
    %660 = vmatpush.msra.mxu0 %v158
    %661 = vmatpush.msra.mxu0 %v155
    %662 = vmatpush.msra.mxu0 %v152
    %663 = vmatmul.f32.gmra.mxu0 %v646
    %v664 = vpop.f32.mrf.mxu0
    %v665 = vadd.f32 %v305, %v664
    %666 = vdwg.mxu0
    %667 = vmatpush.msra.mxu0 %v198
    %668 = vmatpush.msra.mxu0 %v195
    %669 = vmatpush.msra.mxu0 %v192
    %670 = vmatpush.msra.mxu0 %v189
    %671 = vmatpush.msra.mxu0 %v186
    %672 = vmatpush.msra.mxu0 %v183
    %673 = vmatpush.msra.mxu0 %v180
    %674 = vmatpush.msra.mxu0 %v177
    %675 = vmatpush.msra.mxu0 %v174
    %676 = vmatpush.msra.mxu0 %v171
    %677 = vmatpush.msra.mxu0 %v168
    %678 = vmatpush.msra.mxu0 %v165
    %679 = vmatpush.msra.mxu0 %v162
    %680 = vmatpush.msra.mxu0 %v159
    %681 = vmatpush.msra.mxu0 %v156
    %682 = vmatpush.msra.mxu0 %v153
    %683 = vmatmul.f32.gmra.mxu0 %v646
    %v684 = vpop.f32.mrf.mxu0
    %v685 = vadd.f32 %v306, %v684
    %686 = vdwg.mxu0
    %687 = vmatpush.msra.mxu0 %v199
    %688 = vmatpush.msra.mxu0 %v196
    %689 = vmatpush.msra.mxu0 %v193
    %690 = vmatpush.msra.mxu0 %v190
    %691 = vmatpush.msra.mxu0 %v187
    %692 = vmatpush.msra.mxu0 %v184
    %693 = vmatpush.msra.mxu0 %v181
    %694 = vmatpush.msra.mxu0 %v178
    %695 = vmatpush.msra.mxu0 %v175
    %696 = vmatpush.msra.mxu0 %v172
    %697 = vmatpush.msra.mxu0 %v169
    %698 = vmatpush.msra.mxu0 %v166
    %699 = vmatpush.msra.mxu0 %v163
    %700 = vmatpush.msra.mxu0 %v160
    %701 = vmatpush.msra.mxu0 %v157
    %702 = vmatpush.msra.mxu0 %v154
    %703 = vmatmul.f32.gmra.mxu0 %v646
    %v704 = vpop.f32.mrf.mxu0
    %v705 = vadd.f32 %v307, %v704
    %706 = vdwg.mxu0
    %v708 = vrot.slane %v665, 4
    %v710 = vadd.f32 %v247, %v708
    %v711 = vxor.u32 %v710, 2147483648
    %v712 = vmul.f32 %v711, 1.442695
    %v713 = vpow.pop %v712
    %v714 = vadd.f32 %v713, 1.0
    %v715 = vrcp.pop %v714
    %v716 = vmul.f32 %v714, %v715
    %v717 = vsub.f32 1.0, %v716
    %v718 = vmul.f32 %v715, %v717
    %v719 = vadd.f32 %v715, %v718
    %vm720 = vweird.f32 %v714
    %vm721 = vweird.f32 %v715
    %vm722 = vmor %vm720, %vm721
    %v723 = vsel %vm722, %v715, %v719
    %v724 = vand.u32 2147483647, %v714
    %vm725 = vcmp.eq.f32.partialorder %v724, 8.507059e+37
    %v726 = vand.u32 %v714, 2147483648
    %v727 = vor.u32 1.1754944e-38, %v726
    %v728 = vsel %vm725, %v727, %v723
    %v729 = vmul.f32 1.0, %v728
    %v731 = vrot.slane %v685, 4
    %v733 = vadd.f32 %v273, %v731
    %v734 = vxor.u32 %v733, 2147483648
    %v735 = vmul.f32 %v734, 1.442695
    %v736 = vpow.pop %v735
    %v737 = vadd.f32 %v736, 1.0
    %v738 = vrcp.pop %v737
    %v739 = vmul.f32 %v737, %v738
    %v740 = vsub.f32 1.0, %v739
    %v741 = vmul.f32 %v738, %v740
    %v742 = vadd.f32 %v738, %v741
    %vm743 = vweird.f32 %v737
    %vm744 = vweird.f32 %v738
    %vm745 = vmor %vm743, %vm744
    %v746 = vsel %vm745, %v738, %v742
    %v747 = vand.u32 2147483647, %v737
    %vm748 = vcmp.eq.f32.partialorder %v747, 8.507059e+37
    %v749 = vand.u32 %v737, 2147483648
    %v750 = vor.u32 1.1754944e-38, %v749
    %v751 = vsel %vm748, %v750, %v746
    %v752 = vmul.f32 1.0, %v751
    %v754 = vrot.slane %v705, 4
    %v756 = vmul.f32 %v729, %v754
    %v757 = vadd.f32 %v299, %v756
    %v758 = vtanh.pop %v757
    %v759 = vsub.f32 1.0, %v752
    %v760 = vmul.f32 %v759, %v758
    %v762 = vrot.slane %v646, 4
    %v764 = vmul.f32 %v752, %v762
    %v765 = vadd.f32 %v760, %v764
    %v767 = vrot.slane %v765, 4
    %769 = vmatpush.msra.mxu0 %v197
    %770 = vmatpush.msra.mxu0 %v194
    %771 = vmatpush.msra.mxu0 %v191
    %772 = vmatpush.msra.mxu0 %v188
    %773 = vmatpush.msra.mxu0 %v185
    %774 = vmatpush.msra.mxu0 %v182
    %775 = vmatpush.msra.mxu0 %v179
    %776 = vmatpush.msra.mxu0 %v176
    %777 = vmatpush.msra.mxu0 %v173
    %778 = vmatpush.msra.mxu0 %v170
    %779 = vmatpush.msra.mxu0 %v167
    %780 = vmatpush.msra.mxu0 %v164
    %781 = vmatpush.msra.mxu0 %v161
    %782 = vmatpush.msra.mxu0 %v158
    %783 = vmatpush.msra.mxu0 %v155
    %784 = vmatpush.msra.mxu0 %v152
    %785 = vmatmul.f32.gmra.mxu0 %v767
    %v786 = vpop.f32.mrf.mxu0
    %v787 = vadd.f32 %v305, %v786
    %788 = vdwg.mxu0
    %789 = vmatpush.msra.mxu0 %v198
    %790 = vmatpush.msra.mxu0 %v195
    %791 = vmatpush.msra.mxu0 %v192
    %792 = vmatpush.msra.mxu0 %v189
    %793 = vmatpush.msra.mxu0 %v186
    %794 = vmatpush.msra.mxu0 %v183
    %795 = vmatpush.msra.mxu0 %v180
    %796 = vmatpush.msra.mxu0 %v177
    %797 = vmatpush.msra.mxu0 %v174
    %798 = vmatpush.msra.mxu0 %v171
    %799 = vmatpush.msra.mxu0 %v168
    %800 = vmatpush.msra.mxu0 %v165
    %801 = vmatpush.msra.mxu0 %v162
    %802 = vmatpush.msra.mxu0 %v159
    %803 = vmatpush.msra.mxu0 %v156
    %804 = vmatpush.msra.mxu0 %v153
    %805 = vmatmul.f32.gmra.mxu0 %v767
    %v806 = vpop.f32.mrf.mxu0
    %v807 = vadd.f32 %v306, %v806
    %808 = vdwg.mxu0
    %809 = vmatpush.msra.mxu0 %v199
    %810 = vmatpush.msra.mxu0 %v196
    %811 = vmatpush.msra.mxu0 %v193
    %812 = vmatpush.msra.mxu0 %v190
    %813 = vmatpush.msra.mxu0 %v187
    %814 = vmatpush.msra.mxu0 %v184
    %815 = vmatpush.msra.mxu0 %v181
    %816 = vmatpush.msra.mxu0 %v178
    %817 = vmatpush.msra.mxu0 %v175
    %818 = vmatpush.msra.mxu0 %v172
    %819 = vmatpush.msra.mxu0 %v169
    %820 = vmatpush.msra.mxu0 %v166
    %821 = vmatpush.msra.mxu0 %v163
    %822 = vmatpush.msra.mxu0 %v160
    %823 = vmatpush.msra.mxu0 %v157
    %824 = vmatpush.msra.mxu0 %v154
    %825 = vmatmul.f32.gmra.mxu0 %v767
    %v826 = vpop.f32.mrf.mxu0
    %v827 = vadd.f32 %v307, %v826
    %828 = vdwg.mxu0
    %v829 = vadd.f32 %v250, %v787
    %v830 = vxor.u32 %v829, 2147483648
    %v831 = vmul.f32 %v830, 1.442695
    %v832 = vpow.pop %v831
    %v833 = vadd.f32 %v832, 1.0
    %v834 = vrcp.pop %v833
    %v835 = vmul.f32 %v833, %v834
    %v836 = vsub.f32 1.0, %v835
    %v837 = vmul.f32 %v834, %v836
    %v838 = vadd.f32 %v834, %v837
    %vm839 = vweird.f32 %v833
    %vm840 = vweird.f32 %v834
    %vm841 = vmor %vm839, %vm840
    %v842 = vsel %vm841, %v834, %v838
    %v843 = vand.u32 2147483647, %v833
    %vm844 = vcmp.eq.f32.partialorder %v843, 8.507059e+37
    %v845 = vand.u32 %v833, 2147483648
    %v846 = vor.u32 1.1754944e-38, %v845
    %v847 = vsel %vm844, %v846, %v842
    %v848 = vmul.f32 1.0, %v847
    %v849 = vadd.f32 %v276, %v807
    %v850 = vxor.u32 %v849, 2147483648
    %v851 = vmul.f32 %v850, 1.442695
    %v852 = vpow.pop %v851
    %v853 = vadd.f32 %v852, 1.0
    %v854 = vrcp.pop %v853
    %v855 = vmul.f32 %v853, %v854
    %v856 = vsub.f32 1.0, %v855
    %v857 = vmul.f32 %v854, %v856
    %v858 = vadd.f32 %v854, %v857
    %vm859 = vweird.f32 %v853
    %vm860 = vweird.f32 %v854
    %vm861 = vmor %vm859, %vm860
    %v862 = vsel %vm861, %v854, %v858
    %v863 = vand.u32 2147483647, %v853
    %vm864 = vcmp.eq.f32.partialorder %v863, 8.507059e+37
    %v865 = vand.u32 %v853, 2147483648
    %v866 = vor.u32 1.1754944e-38, %v865
    %v867 = vsel %vm864, %v866, %v862
    %v868 = vmul.f32 1.0, %v867
    %v869 = vmul.f32 %v848, %v827
    %v870 = vadd.f32 %v302, %v869
    %v871 = vtanh.pop %v870
    %v872 = vsub.f32 1.0, %v868
    %v873 = vmul.f32 %v872, %v871
    %v874 = vmul.f32 %v868, %v767
    %v875 = vadd.f32 %v873, %v874
    %v876 = vld [vmem:[%s0] sm:$0x3]
    %v877 = vlaneseq
    %v878 = vand.u32 %v877, 127
    %879 = vset.pattern.permute.xlu0 0
    %880 = vperm.xlu0 %879, %v876
    %v881 = vpop.permute.xlu0 %880
    %vm882 = vcmp.eq.s32.totalorder %v878, %v881
    %v883 = vsel %vm882, 1, 0
    %v884 = vcvt.s32.f32 %v883
    %885 = vset.pattern.permute.xlu0 1
    %886 = vperm.xlu0 %885, %v876
    %v887 = vpop.permute.xlu0 %886
    %vm888 = vcmp.eq.s32.totalorder %v878, %v887
    %v889 = vsel %vm888, 1, 0
    %v890 = vcvt.s32.f32 %v889
    %891 = vset.pattern.permute.xlu0 2
    %892 = vperm.xlu0 %891, %v876
    %v893 = vpop.permute.xlu0 %892
    %vm894 = vcmp.eq.s32.totalorder %v878, %v893
    %v895 = vsel %vm894, 1, 0
    %v896 = vcvt.s32.f32 %v895
    %v898 = vsel %vm78, %v884, 0
    %900 = vmatpush.msra.mxu0 0.0
    %901 = vmatpush.msra.mxu0 0.0
    %902 = vmatpush.msra.mxu0 0.0
    %903 = vmatpush.msra.mxu0 0.0
    %904 = vmatpush.msra.mxu0 0.0
    %905 = vmatpush.msra.mxu0 0.0
    %906 = vmatpush.msra.mxu0 0.0
    %907 = vmatpush.msra.mxu0 0.0
    %908 = vmatpush.msra.mxu0 0.0
    %909 = vmatpush.msra.mxu0 0.0
    %910 = vmatpush.msra.mxu0 0.0
    %911 = vmatpush.msra.mxu0 0.0
    %912 = vmatpush.msra.mxu0 0.0
    %913 = vmatpush.msra.mxu0 0.0
    %914 = vmatpush.msra.mxu0 0.0
    %915 = vmatpush.msra.mxu0 %v151
    %916 = vmatmul.f32.gmra.mxu0 %v898
    %v917 = vpop.f32.mrf.mxu0
    %v918 = vadd.f32 0.0, %v917
    %919 = vdwg.mxu0
    %v921 = vsel %vm78, %v890, 0
    %923 = vmatpush.msra.mxu0 0.0
    %924 = vmatpush.msra.mxu0 0.0
    %925 = vmatpush.msra.mxu0 0.0
    %926 = vmatpush.msra.mxu0 0.0
    %927 = vmatpush.msra.mxu0 0.0
    %928 = vmatpush.msra.mxu0 0.0
    %929 = vmatpush.msra.mxu0 0.0
    %930 = vmatpush.msra.mxu0 0.0
    %931 = vmatpush.msra.mxu0 0.0
    %932 = vmatpush.msra.mxu0 0.0
    %933 = vmatpush.msra.mxu0 0.0
    %934 = vmatpush.msra.mxu0 0.0
    %935 = vmatpush.msra.mxu0 0.0
    %936 = vmatpush.msra.mxu0 0.0
    %937 = vmatpush.msra.mxu0 0.0
    %938 = vmatpush.msra.mxu0 %v151
    %939 = vmatmul.f32.gmra.mxu0 %v921
    %v940 = vpop.f32.mrf.mxu0
    %v941 = vadd.f32 0.0, %v940
    %942 = vdwg.mxu0
    %v943 = vld [vmem:[%s5] sm:$0xff]
    %v944 = vld [vmem:[%s5 + $0x8] sm:$0x3]
    %vm945 = vcmask 80896
    %v947 = vsel %vm945, %v896, 0
    %v950 = vsel %vm52, %v944, 0
    %952 = vmatpush.msra.mxu0 0.0
    %953 = vmatpush.msra.mxu0 0.0
    %954 = vmatpush.msra.mxu0 0.0
    %955 = vmatpush.msra.mxu0 0.0
    %956 = vmatpush.msra.mxu0 0.0
    %957 = vmatpush.msra.mxu0 0.0
    %958 = vmatpush.msra.mxu0 0.0
    %959 = vmatpush.msra.mxu0 0.0
    %960 = vmatpush.msra.mxu0 0.0
    %961 = vmatpush.msra.mxu0 0.0
    %962 = vmatpush.msra.mxu0 0.0
    %963 = vmatpush.msra.mxu0 0.0
    %964 = vmatpush.msra.mxu0 0.0
    %965 = vmatpush.msra.mxu0 0.0
    %966 = vmatpush.msra.mxu0 %v950
    %967 = vmatpush.msra.mxu0 %v943
    %968 = vmatmul.f32.gmra.mxu0 %v947
    %v969 = vpop.f32.mrf.mxu0
    %v970 = vadd.f32 0.0, %v969
    %971 = vdwg.mxu0
    %v972 = vld [vmem:[%s8] sm:$0x3]
    %v973 = vld [vmem:[%s9] sm:$0xff]
    %v974 = vld [vmem:[%s9 + $0x8] sm:$0xff]
    %v975 = vld [vmem:[%s9 + $0x10] sm:$0xff]
    %v976 = vld [vmem:[%s9 + $0x18] sm:$0xff]
    %v977 = vld [vmem:[%s9 + $0x20] sm:$0xff]
    %v978 = vld [vmem:[%s9 + $0x28] sm:$0xff]
    %v979 = vld [vmem:[%s9 + $0x30] sm:$0xff]
    %v980 = vld [vmem:[%s9 + $0x38] sm:$0xff]
    %v981 = vld [vmem:[%s9 + $0x40] sm:$0xff]
    %v982 = vld [vmem:[%s9 + $0x48] sm:$0xff]
    %v983 = vld [vmem:[%s9 + $0x50] sm:$0xff]
    %v984 = vld [vmem:[%s9 + $0x58] sm:$0xff]
    %v985 = vld [vmem:[%s9 + $0x60] sm:$0xff]
    %v986 = vld [vmem:[%s9 + $0x68] sm:$0xff]
    %v987 = vld [vmem:[%s9 + $0x70] sm:$0xff]
    %v988 = vld [vmem:[%s9 + $0x78] sm:$0xff]
    %v989 = vld [vmem:[%s9 + $0x80] sm:$0xff]
    %v990 = vld [vmem:[%s9 + $0x88] sm:$0xff]
    %v991 = vld [vmem:[%s9 + $0x90] sm:$0xff]
    %v992 = vld [vmem:[%s9 + $0x98] sm:$0xff]
    %v993 = vld [vmem:[%s9 + $0xa0] sm:$0xff]
    %v994 = vld [vmem:[%s9 + $0xa8] sm:$0xff]
    %v995 = vld [vmem:[%s9 + $0xb0] sm:$0xff]
    %v996 = vld [vmem:[%s9 + $0xb8] sm:$0xff]
    %vm997 = vcmask 261120
    %v999 = vsel %vm997, %v918, 0
    %1001 = vmatpush.msra.mxu0 0.0
    %1002 = vmatpush.msra.mxu0 0.0
    %1003 = vmatpush.msra.mxu0 0.0
    %1004 = vmatpush.msra.mxu0 0.0
    %1005 = vmatpush.msra.mxu0 0.0
    %1006 = vmatpush.msra.mxu0 0.0
    %1007 = vmatpush.msra.mxu0 0.0
    %1008 = vmatpush.msra.mxu0 0.0
    %1009 = vmatpush.msra.mxu0 0.0
    %1010 = vmatpush.msra.mxu0 0.0
    %1011 = vmatpush.msra.mxu0 0.0
    %1012 = vmatpush.msra.mxu0 0.0
    %1013 = vmatpush.msra.mxu0 %v993
    %1014 = vmatpush.msra.mxu0 %v989
    %1015 = vmatpush.msra.mxu0 %v985
    %1016 = vmatpush.msra.mxu0 %v981
    %1017 = vmatmul.f32.gmra.mxu0 %v999
    %v1018 = vpop.f32.mrf.mxu0
    %v1019 = vadd.f32 0.0, %v1018
    %1020 = vdwg.mxu0
    %1021 = vmatpush.msra.mxu0 0.0
    %1022 = vmatpush.msra.mxu0 0.0
    %1023 = vmatpush.msra.mxu0 0.0
    %1024 = vmatpush.msra.mxu0 0.0
    %1025 = vmatpush.msra.mxu0 0.0
    %1026 = vmatpush.msra.mxu0 0.0
    %1027 = vmatpush.msra.mxu0 0.0
    %1028 = vmatpush.msra.mxu0 0.0
    %1029 = vmatpush.msra.mxu0 0.0
    %1030 = vmatpush.msra.mxu0 0.0
    %1031 = vmatpush.msra.mxu0 0.0
    %1032 = vmatpush.msra.mxu0 0.0
    %1033 = vmatpush.msra.mxu0 %v994
    %1034 = vmatpush.msra.mxu0 %v990
    %1035 = vmatpush.msra.mxu0 %v986
    %1036 = vmatpush.msra.mxu0 %v982
    %1037 = vmatmul.f32.gmra.mxu0 %v999
    %v1038 = vpop.f32.mrf.mxu0
    %v1039 = vadd.f32 0.0, %v1038
    %1040 = vdwg.mxu0
    %1041 = vmatpush.msra.mxu0 0.0
    %1042 = vmatpush.msra.mxu0 0.0
    %1043 = vmatpush.msra.mxu0 0.0
    %1044 = vmatpush.msra.mxu0 0.0
    %1045 = vmatpush.msra.mxu0 0.0
    %1046 = vmatpush.msra.mxu0 0.0
    %1047 = vmatpush.msra.mxu0 0.0
    %1048 = vmatpush.msra.mxu0 0.0
    %1049 = vmatpush.msra.mxu0 0.0
    %1050 = vmatpush.msra.mxu0 0.0
    %1051 = vmatpush.msra.mxu0 0.0
    %1052 = vmatpush.msra.mxu0 0.0
    %1053 = vmatpush.msra.mxu0 %v995
    %1054 = vmatpush.msra.mxu0 %v991
    %1055 = vmatpush.msra.mxu0 %v987
    %1056 = vmatpush.msra.mxu0 %v983
    %1057 = vmatmul.f32.gmra.mxu0 %v999
    %v1058 = vpop.f32.mrf.mxu0
    %v1059 = vadd.f32 0.0, %v1058
    %1060 = vdwg.mxu0
    %1061 = vmatpush.msra.mxu0 0.0
    %1062 = vmatpush.msra.mxu0 0.0
    %1063 = vmatpush.msra.mxu0 0.0
    %1064 = vmatpush.msra.mxu0 0.0
    %1065 = vmatpush.msra.mxu0 0.0
    %1066 = vmatpush.msra.mxu0 0.0
    %1067 = vmatpush.msra.mxu0 0.0
    %1068 = vmatpush.msra.mxu0 0.0
    %1069 = vmatpush.msra.mxu0 0.0
    %1070 = vmatpush.msra.mxu0 0.0
    %1071 = vmatpush.msra.mxu0 0.0
    %1072 = vmatpush.msra.mxu0 0.0
    %1073 = vmatpush.msra.mxu0 %v996
    %1074 = vmatpush.msra.mxu0 %v992
    %1075 = vmatpush.msra.mxu0 %v988
    %1076 = vmatpush.msra.mxu0 %v984
    %1077 = vmatmul.f32.gmra.mxu0 %v999
    %v1078 = vpop.f32.mrf.mxu0
    %v1079 = vadd.f32 0.0, %v1078
    %1080 = vdwg.mxu0
    %v1082 = vsel %vm105, %v972, 0
    %1084 = vmatpush.msra.mxu0 0.0
    %1085 = vmatpush.msra.mxu0 0.0
    %1086 = vmatpush.msra.mxu0 0.0
    %1087 = vmatpush.msra.mxu0 0.0
    %1088 = vmatpush.msra.mxu0 0.0
    %1089 = vmatpush.msra.mxu0 0.0
    %1090 = vmatpush.msra.mxu0 0.0
    %1091 = vmatpush.msra.mxu0 0.0
    %1092 = vmatpush.msra.mxu0 0.0
    %1093 = vmatpush.msra.mxu0 0.0
    %1094 = vmatpush.msra.mxu0 0.0
    %1095 = vmatpush.msra.mxu0 0.0
    %1096 = vmatpush.msra.mxu0 0.0
    %1097 = vmatpush.msra.mxu0 0.0
    %1098 = vmatpush.msra.mxu0 %v977
    %1099 = vmatpush.msra.mxu0 %v973
    %1100 = vmatmul.f32.gmra.mxu0 %v1082
    %v1101 = vpop.f32.mrf.mxu0
    %v1102 = vadd.f32 %v1019, %v1101
    %1103 = vdwg.mxu0
    %1104 = vmatpush.msra.mxu0 0.0
    %1105 = vmatpush.msra.mxu0 0.0
    %1106 = vmatpush.msra.mxu0 0.0
    %1107 = vmatpush.msra.mxu0 0.0
    %1108 = vmatpush.msra.mxu0 0.0
    %1109 = vmatpush.msra.mxu0 0.0
    %1110 = vmatpush.msra.mxu0 0.0
    %1111 = vmatpush.msra.mxu0 0.0
    %1112 = vmatpush.msra.mxu0 0.0
    %1113 = vmatpush.msra.mxu0 0.0
    %1114 = vmatpush.msra.mxu0 0.0
    %1115 = vmatpush.msra.mxu0 0.0
    %1116 = vmatpush.msra.mxu0 0.0
    %1117 = vmatpush.msra.mxu0 0.0
    %1118 = vmatpush.msra.mxu0 %v978
    %1119 = vmatpush.msra.mxu0 %v974
    %1120 = vmatmul.f32.gmra.mxu0 %v1082
    %v1121 = vpop.f32.mrf.mxu0
    %v1122 = vadd.f32 %v1039, %v1121
    %1123 = vdwg.mxu0
    %1124 = vmatpush.msra.mxu0 0.0
    %1125 = vmatpush.msra.mxu0 0.0
    %1126 = vmatpush.msra.mxu0 0.0
    %1127 = vmatpush.msra.mxu0 0.0
    %1128 = vmatpush.msra.mxu0 0.0
    %1129 = vmatpush.msra.mxu0 0.0
    %1130 = vmatpush.msra.mxu0 0.0
    %1131 = vmatpush.msra.mxu0 0.0
    %1132 = vmatpush.msra.mxu0 0.0
    %1133 = vmatpush.msra.mxu0 0.0
    %1134 = vmatpush.msra.mxu0 0.0
    %1135 = vmatpush.msra.mxu0 0.0
    %1136 = vmatpush.msra.mxu0 0.0
    %1137 = vmatpush.msra.mxu0 0.0
    %1138 = vmatpush.msra.mxu0 %v979
    %1139 = vmatpush.msra.mxu0 %v975
    %1140 = vmatmul.f32.gmra.mxu0 %v1082
    %v1141 = vpop.f32.mrf.mxu0
    %v1142 = vadd.f32 %v1059, %v1141
    %1143 = vdwg.mxu0
    %1144 = vmatpush.msra.mxu0 0.0
    %1145 = vmatpush.msra.mxu0 0.0
    %1146 = vmatpush.msra.mxu0 0.0
    %1147 = vmatpush.msra.mxu0 0.0
    %1148 = vmatpush.msra.mxu0 0.0
    %1149 = vmatpush.msra.mxu0 0.0
    %1150 = vmatpush.msra.mxu0 0.0
    %1151 = vmatpush.msra.mxu0 0.0
    %1152 = vmatpush.msra.mxu0 0.0
    %1153 = vmatpush.msra.mxu0 0.0
    %1154 = vmatpush.msra.mxu0 0.0
    %1155 = vmatpush.msra.mxu0 0.0
    %1156 = vmatpush.msra.mxu0 0.0
    %1157 = vmatpush.msra.mxu0 0.0
    %1158 = vmatpush.msra.mxu0 %v980
    %1159 = vmatpush.msra.mxu0 %v976
    %1160 = vmatmul.f32.gmra.mxu0 %v1082
    %v1161 = vpop.f32.mrf.mxu0
    %v1162 = vadd.f32 %v1079, %v1161
    %1163 = vdwg.mxu0
    %v1164 = vld [vmem:[%s9 + $0xc0] sm:$0xff]
    %v1165 = vld [vmem:[%s9 + $0xc8] sm:$0xff]
    %v1166 = vld [vmem:[%s9 + $0xd0] sm:$0xff]
    %v1167 = vld [vmem:[%s9 + $0xd8] sm:$0xff]
    %v1168 = vld [vmem:[%s9 + $0xe0] sm:$0xff]
    %v1169 = vld [vmem:[%s9 + $0xe8] sm:$0xff]
    %v1170 = vld [vmem:[%s9 + $0xf0] sm:$0xff]
    %v1171 = vld [vmem:[%s9 + $0xf8] sm:$0xff]
    %v1172 = vld [vmem:[%s9 + $0x100] sm:$0xff]
    %v1173 = vld [vmem:[%s9 + $0x108] sm:$0xff]
    %v1174 = vld [vmem:[%s9 + $0x110] sm:$0xff]
    %v1175 = vld [vmem:[%s9 + $0x118] sm:$0xff]
    %v1176 = vld [vmem:[%s9 + $0x120] sm:$0xff]
    %v1177 = vld [vmem:[%s9 + $0x128] sm:$0xff]
    %v1178 = vld [vmem:[%s9 + $0x130] sm:$0xff]
    %v1179 = vld [vmem:[%s9 + $0x138] sm:$0xff]
    %v1181 = vsel %vm997, %v941, 0
    %1183 = vmatpush.msra.mxu0 0.0
    %1184 = vmatpush.msra.mxu0 0.0
    %1185 = vmatpush.msra.mxu0 0.0
    %1186 = vmatpush.msra.mxu0 0.0
    %1187 = vmatpush.msra.mxu0 0.0
    %1188 = vmatpush.msra.mxu0 0.0
    %1189 = vmatpush.msra.mxu0 0.0
    %1190 = vmatpush.msra.mxu0 0.0
    %1191 = vmatpush.msra.mxu0 0.0
    %1192 = vmatpush.msra.mxu0 0.0
    %1193 = vmatpush.msra.mxu0 0.0
    %1194 = vmatpush.msra.mxu0 0.0
    %1195 = vmatpush.msra.mxu0 %v1176
    %1196 = vmatpush.msra.mxu0 %v1172
    %1197 = vmatpush.msra.mxu0 %v1168
    %1198 = vmatpush.msra.mxu0 %v1164
    %1199 = vmatmul.f32.gmra.mxu0 %v1181
    %v1200 = vpop.f32.mrf.mxu0
    %v1201 = vadd.f32 0.0, %v1200
    %1202 = vdwg.mxu0
    %1203 = vmatpush.msra.mxu0 0.0
    %1204 = vmatpush.msra.mxu0 0.0
    %1205 = vmatpush.msra.mxu0 0.0
    %1206 = vmatpush.msra.mxu0 0.0
    %1207 = vmatpush.msra.mxu0 0.0
    %1208 = vmatpush.msra.mxu0 0.0
    %1209 = vmatpush.msra.mxu0 0.0
    %1210 = vmatpush.msra.mxu0 0.0
    %1211 = vmatpush.msra.mxu0 0.0
    %1212 = vmatpush.msra.mxu0 0.0
    %1213 = vmatpush.msra.mxu0 0.0
    %1214 = vmatpush.msra.mxu0 0.0
    %1215 = vmatpush.msra.mxu0 %v1177
    %1216 = vmatpush.msra.mxu0 %v1173
    %1217 = vmatpush.msra.mxu0 %v1169
    %1218 = vmatpush.msra.mxu0 %v1165
    %1219 = vmatmul.f32.gmra.mxu0 %v1181
    %v1220 = vpop.f32.mrf.mxu0
    %v1221 = vadd.f32 0.0, %v1220
    %1222 = vdwg.mxu0
    %1223 = vmatpush.msra.mxu0 0.0
    %1224 = vmatpush.msra.mxu0 0.0
    %1225 = vmatpush.msra.mxu0 0.0
    %1226 = vmatpush.msra.mxu0 0.0
    %1227 = vmatpush.msra.mxu0 0.0
    %1228 = vmatpush.msra.mxu0 0.0
    %1229 = vmatpush.msra.mxu0 0.0
    %1230 = vmatpush.msra.mxu0 0.0
    %1231 = vmatpush.msra.mxu0 0.0
    %1232 = vmatpush.msra.mxu0 0.0
    %1233 = vmatpush.msra.mxu0 0.0
    %1234 = vmatpush.msra.mxu0 0.0
    %1235 = vmatpush.msra.mxu0 %v1178
    %1236 = vmatpush.msra.mxu0 %v1174
    %1237 = vmatpush.msra.mxu0 %v1170
    %1238 = vmatpush.msra.mxu0 %v1166
    %1239 = vmatmul.f32.gmra.mxu0 %v1181
    %v1240 = vpop.f32.mrf.mxu0
    %v1241 = vadd.f32 0.0, %v1240
    %1242 = vdwg.mxu0
    %1243 = vmatpush.msra.mxu0 0.0
    %1244 = vmatpush.msra.mxu0 0.0
    %1245 = vmatpush.msra.mxu0 0.0
    %1246 = vmatpush.msra.mxu0 0.0
    %1247 = vmatpush.msra.mxu0 0.0
    %1248 = vmatpush.msra.mxu0 0.0
    %1249 = vmatpush.msra.mxu0 0.0
    %1250 = vmatpush.msra.mxu0 0.0
    %1251 = vmatpush.msra.mxu0 0.0
    %1252 = vmatpush.msra.mxu0 0.0
    %1253 = vmatpush.msra.mxu0 0.0
    %1254 = vmatpush.msra.mxu0 0.0
    %1255 = vmatpush.msra.mxu0 %v1179
    %1256 = vmatpush.msra.mxu0 %v1175
    %1257 = vmatpush.msra.mxu0 %v1171
    %1258 = vmatpush.msra.mxu0 %v1167
    %1259 = vmatmul.f32.gmra.mxu0 %v1181
    %v1260 = vpop.f32.mrf.mxu0
    %v1261 = vadd.f32 0.0, %v1260
    %1262 = vdwg.mxu0
    %v1263 = vadd.f32 %v1102, %v1201
    %v1264 = vadd.f32 %v1122, %v1221
    %v1265 = vadd.f32 %v1142, %v1241
    %v1266 = vadd.f32 %v1162, %v1261
    %v1267 = vld [vmem:[%s9 + $0x140] sm:$0xff]
    %v1268 = vld [vmem:[%s9 + $0x148] sm:$0xff]
    %v1269 = vld [vmem:[%s9 + $0x150] sm:$0xff]
    %v1270 = vld [vmem:[%s9 + $0x158] sm:$0xff]
    %v1271 = vld [vmem:[%s9 + $0x160] sm:$0xff]
    %v1272 = vld [vmem:[%s9 + $0x168] sm:$0xff]
    %v1273 = vld [vmem:[%s9 + $0x170] sm:$0xff]
    %v1274 = vld [vmem:[%s9 + $0x178] sm:$0xff]
    %v1275 = vld [vmem:[%s9 + $0x180] sm:$0xff]
    %v1276 = vld [vmem:[%s9 + $0x188] sm:$0xff]
    %v1277 = vld [vmem:[%s9 + $0x190] sm:$0xff]
    %v1278 = vld [vmem:[%s9 + $0x198] sm:$0xff]
    %v1279 = vld [vmem:[%s9 + $0x1a0] sm:$0xff]
    %v1280 = vld [vmem:[%s9 + $0x1a8] sm:$0xff]
    %v1281 = vld [vmem:[%s9 + $0x1b0] sm:$0xff]
    %v1282 = vld [vmem:[%s9 + $0x1b8] sm:$0xff]
    %v1284 = vsel %vm997, %v970, 0
    %1286 = vmatpush.msra.mxu0 0.0
    %1287 = vmatpush.msra.mxu0 0.0
    %1288 = vmatpush.msra.mxu0 0.0
    %1289 = vmatpush.msra.mxu0 0.0
    %1290 = vmatpush.msra.mxu0 0.0
    %1291 = vmatpush.msra.mxu0 0.0
    %1292 = vmatpush.msra.mxu0 0.0
    %1293 = vmatpush.msra.mxu0 0.0
    %1294 = vmatpush.msra.mxu0 0.0
    %1295 = vmatpush.msra.mxu0 0.0
    %1296 = vmatpush.msra.mxu0 0.0
    %1297 = vmatpush.msra.mxu0 0.0
    %1298 = vmatpush.msra.mxu0 %v1279
    %1299 = vmatpush.msra.mxu0 %v1275
    %1300 = vmatpush.msra.mxu0 %v1271
    %1301 = vmatpush.msra.mxu0 %v1267
    %1302 = vmatmul.f32.gmra.mxu0 %v1284
    %v1303 = vpop.f32.mrf.mxu0
    %v1304 = vadd.f32 0.0, %v1303
    %1305 = vdwg.mxu0
    %1306 = vmatpush.msra.mxu0 0.0
    %1307 = vmatpush.msra.mxu0 0.0
    %1308 = vmatpush.msra.mxu0 0.0
    %1309 = vmatpush.msra.mxu0 0.0
    %1310 = vmatpush.msra.mxu0 0.0
    %1311 = vmatpush.msra.mxu0 0.0
    %1312 = vmatpush.msra.mxu0 0.0
    %1313 = vmatpush.msra.mxu0 0.0
    %1314 = vmatpush.msra.mxu0 0.0
    %1315 = vmatpush.msra.mxu0 0.0
    %1316 = vmatpush.msra.mxu0 0.0
    %1317 = vmatpush.msra.mxu0 0.0
    %1318 = vmatpush.msra.mxu0 %v1280
    %1319 = vmatpush.msra.mxu0 %v1276
    %1320 = vmatpush.msra.mxu0 %v1272
    %1321 = vmatpush.msra.mxu0 %v1268
    %1322 = vmatmul.f32.gmra.mxu0 %v1284
    %v1323 = vpop.f32.mrf.mxu0
    %v1324 = vadd.f32 0.0, %v1323
    %1325 = vdwg.mxu0
    %1326 = vmatpush.msra.mxu0 0.0
    %1327 = vmatpush.msra.mxu0 0.0
    %1328 = vmatpush.msra.mxu0 0.0
    %1329 = vmatpush.msra.mxu0 0.0
    %1330 = vmatpush.msra.mxu0 0.0
    %1331 = vmatpush.msra.mxu0 0.0
    %1332 = vmatpush.msra.mxu0 0.0
    %1333 = vmatpush.msra.mxu0 0.0
    %1334 = vmatpush.msra.mxu0 0.0
    %1335 = vmatpush.msra.mxu0 0.0
    %1336 = vmatpush.msra.mxu0 0.0
    %1337 = vmatpush.msra.mxu0 0.0
    %1338 = vmatpush.msra.mxu0 %v1281
    %1339 = vmatpush.msra.mxu0 %v1277
    %1340 = vmatpush.msra.mxu0 %v1273
    %1341 = vmatpush.msra.mxu0 %v1269
    %1342 = vmatmul.f32.gmra.mxu0 %v1284
    %v1343 = vpop.f32.mrf.mxu0
    %v1344 = vadd.f32 0.0, %v1343
    %1345 = vdwg.mxu0
    %1346 = vmatpush.msra.mxu0 0.0
    %1347 = vmatpush.msra.mxu0 0.0
    %1348 = vmatpush.msra.mxu0 0.0
    %1349 = vmatpush.msra.mxu0 0.0
    %1350 = vmatpush.msra.mxu0 0.0
    %1351 = vmatpush.msra.mxu0 0.0
    %1352 = vmatpush.msra.mxu0 0.0
    %1353 = vmatpush.msra.mxu0 0.0
    %1354 = vmatpush.msra.mxu0 0.0
    %1355 = vmatpush.msra.mxu0 0.0
    %1356 = vmatpush.msra.mxu0 0.0
    %1357 = vmatpush.msra.mxu0 0.0
    %1358 = vmatpush.msra.mxu0 %v1282
    %1359 = vmatpush.msra.mxu0 %v1278
    %1360 = vmatpush.msra.mxu0 %v1274
    %1361 = vmatpush.msra.mxu0 %v1270
    %1362 = vmatmul.f32.gmra.mxu0 %v1284
    %v1363 = vpop.f32.mrf.mxu0
    %v1364 = vadd.f32 0.0, %v1363
    %1365 = vdwg.mxu0
    %v1366 = vadd.f32 %v1263, %v1304
    %v1367 = vadd.f32 %v1264, %v1324
    %v1368 = vadd.f32 %v1265, %v1344
    %v1369 = vadd.f32 %v1266, %v1364
    %v1370 = vld [vmem:[%s9 + $0x1c0] sm:$0xff]
    %v1371 = vld [vmem:[%s9 + $0x1c8] sm:$0xff]
    %v1372 = vld [vmem:[%s9 + $0x1d0] sm:$0xff]
    %v1373 = vld [vmem:[%s9 + $0x1d8] sm:$0xff]
    %v1374 = vld [vmem:[%s9 + $0x1e0] sm:$0xff]
    %v1375 = vld [vmem:[%s9 + $0x1e8] sm:$0xff]
    %v1376 = vld [vmem:[%s9 + $0x1f0] sm:$0xff]
    %v1377 = vld [vmem:[%s9 + $0x1f8] sm:$0xff]
    %v1378 = vld [vmem:[%s9 + $0x200] sm:$0xff]
    %v1379 = vld [vmem:[%s9 + $0x208] sm:$0xff]
    %v1380 = vld [vmem:[%s9 + $0x210] sm:$0xff]
    %v1381 = vld [vmem:[%s9 + $0x218] sm:$0xff]
    %v1382 = vld [vmem:[%s9 + $0x220] sm:$0xff]
    %v1383 = vld [vmem:[%s9 + $0x228] sm:$0xff]
    %v1384 = vld [vmem:[%s9 + $0x230] sm:$0xff]
    %v1385 = vld [vmem:[%s9 + $0x238] sm:$0xff]
    %v1386 = vld [vmem:[%s9 + $0x240] sm:$0xff]
    %v1387 = vld [vmem:[%s9 + $0x248] sm:$0xff]
    %v1388 = vld [vmem:[%s9 + $0x250] sm:$0xff]
    %v1389 = vld [vmem:[%s9 + $0x258] sm:$0xff]
    %v1390 = vld [vmem:[%s9 + $0x260] sm:$0xff]
    %v1391 = vld [vmem:[%s9 + $0x268] sm:$0xff]
    %v1392 = vld [vmem:[%s9 + $0x270] sm:$0xff]
    %v1393 = vld [vmem:[%s9 + $0x278] sm:$0xff]
    %v1394 = vld [vmem:[%s9 + $0x280] sm:$0xff]
    %v1395 = vld [vmem:[%s9 + $0x288] sm:$0xff]
    %v1396 = vld [vmem:[%s9 + $0x290] sm:$0xff]
    %v1397 = vld [vmem:[%s9 + $0x298] sm:$0xff]
    %v1398 = vld [vmem:[%s9 + $0x2a0] sm:$0xff]
    %v1399 = vld [vmem:[%s9 + $0x2a8] sm:$0xff]
    %v1400 = vld [vmem:[%s9 + $0x2b0] sm:$0xff]
    %v1401 = vld [vmem:[%s9 + $0x2b8] sm:$0xff]
    %v1402 = vld [vmem:[%s9 + $0x2c0] sm:$0xff]
    %v1403 = vld [vmem:[%s9 + $0x2c8] sm:$0xff]
    %v1404 = vld [vmem:[%s9 + $0x2d0] sm:$0xff]
    %v1405 = vld [vmem:[%s9 + $0x2d8] sm:$0xff]
    %v1406 = vld [vmem:[%s9 + $0x2e0] sm:$0xff]
    %v1407 = vld [vmem:[%s9 + $0x2e8] sm:$0xff]
    %v1408 = vld [vmem:[%s9 + $0x2f0] sm:$0xff]
    %v1409 = vld [vmem:[%s9 + $0x2f8] sm:$0xff]
    %v1410 = vld [vmem:[%s9 + $0x300] sm:$0xff]
    %v1411 = vld [vmem:[%s9 + $0x308] sm:$0xff]
    %v1412 = vld [vmem:[%s9 + $0x310] sm:$0xff]
    %v1413 = vld [vmem:[%s9 + $0x318] sm:$0xff]
    %v1414 = vld [vmem:[%s9 + $0x320] sm:$0xff]
    %v1415 = vld [vmem:[%s9 + $0x328] sm:$0xff]
    %v1416 = vld [vmem:[%s9 + $0x330] sm:$0xff]
    %v1417 = vld [vmem:[%s9 + $0x338] sm:$0xff]
    %v1418 = vld [vmem:[%s9 + $0x340] sm:$0xff]
    %v1419 = vld [vmem:[%s9 + $0x348] sm:$0xff]
    %v1420 = vld [vmem:[%s9 + $0x350] sm:$0xff]
    %v1421 = vld [vmem:[%s9 + $0x358] sm:$0xff]
    %v1422 = vld [vmem:[%s9 + $0x360] sm:$0xff]
    %v1423 = vld [vmem:[%s9 + $0x368] sm:$0xff]
    %v1424 = vld [vmem:[%s9 + $0x370] sm:$0xff]
    %v1425 = vld [vmem:[%s9 + $0x378] sm:$0xff]
    %v1426 = vld [vmem:[%s9 + $0x380] sm:$0xff]
    %v1427 = vld [vmem:[%s9 + $0x388] sm:$0xff]
    %v1428 = vld [vmem:[%s9 + $0x390] sm:$0xff]
    %v1429 = vld [vmem:[%s9 + $0x398] sm:$0xff]
    %v1430 = vld [vmem:[%s9 + $0x3a0] sm:$0xff]
    %v1431 = vld [vmem:[%s9 + $0x3a8] sm:$0xff]
    %v1432 = vld [vmem:[%s9 + $0x3b0] sm:$0xff]
    %v1433 = vld [vmem:[%s9 + $0x3b8] sm:$0xff]
    %1434 = vmatpush.msra.mxu0 %v1430
    %1435 = vmatpush.msra.mxu0 %v1426
    %1436 = vmatpush.msra.mxu0 %v1422
    %1437 = vmatpush.msra.mxu0 %v1418
    %1438 = vmatpush.msra.mxu0 %v1414
    %1439 = vmatpush.msra.mxu0 %v1410
    %1440 = vmatpush.msra.mxu0 %v1406
    %1441 = vmatpush.msra.mxu0 %v1402
    %1442 = vmatpush.msra.mxu0 %v1398
    %1443 = vmatpush.msra.mxu0 %v1394
    %1444 = vmatpush.msra.mxu0 %v1390
    %1445 = vmatpush.msra.mxu0 %v1386
    %1446 = vmatpush.msra.mxu0 %v1382
    %1447 = vmatpush.msra.mxu0 %v1378
    %1448 = vmatpush.msra.mxu0 %v1374
    %1449 = vmatpush.msra.mxu0 %v1370
    %1450 = vmatmul.f32.gmra.mxu0 %v875
    %v1451 = vpop.f32.mrf.mxu0
    %v1452 = vadd.f32 0.0, %v1451
    %1453 = vdwg.mxu0
    %1454 = vmatpush.msra.mxu0 %v1431
    %1455 = vmatpush.msra.mxu0 %v1427
    %1456 = vmatpush.msra.mxu0 %v1423
    %1457 = vmatpush.msra.mxu0 %v1419
    %1458 = vmatpush.msra.mxu0 %v1415
    %1459 = vmatpush.msra.mxu0 %v1411
    %1460 = vmatpush.msra.mxu0 %v1407
    %1461 = vmatpush.msra.mxu0 %v1403
    %1462 = vmatpush.msra.mxu0 %v1399
    %1463 = vmatpush.msra.mxu0 %v1395
    %1464 = vmatpush.msra.mxu0 %v1391
    %1465 = vmatpush.msra.mxu0 %v1387
    %1466 = vmatpush.msra.mxu0 %v1383
    %1467 = vmatpush.msra.mxu0 %v1379
    %1468 = vmatpush.msra.mxu0 %v1375
    %1469 = vmatpush.msra.mxu0 %v1371
    %1470 = vmatmul.f32.gmra.mxu0 %v875
    %v1471 = vpop.f32.mrf.mxu0
    %v1472 = vadd.f32 0.0, %v1471
    %1473 = vdwg.mxu0
    %1474 = vmatpush.msra.mxu0 %v1432
    %1475 = vmatpush.msra.mxu0 %v1428
    %1476 = vmatpush.msra.mxu0 %v1424
    %1477 = vmatpush.msra.mxu0 %v1420
    %1478 = vmatpush.msra.mxu0 %v1416
    %1479 = vmatpush.msra.mxu0 %v1412
    %1480 = vmatpush.msra.mxu0 %v1408
    %1481 = vmatpush.msra.mxu0 %v1404
    %1482 = vmatpush.msra.mxu0 %v1400
    %1483 = vmatpush.msra.mxu0 %v1396
    %1484 = vmatpush.msra.mxu0 %v1392
    %1485 = vmatpush.msra.mxu0 %v1388
    %1486 = vmatpush.msra.mxu0 %v1384
    %1487 = vmatpush.msra.mxu0 %v1380
    %1488 = vmatpush.msra.mxu0 %v1376
    %1489 = vmatpush.msra.mxu0 %v1372
    %1490 = vmatmul.f32.gmra.mxu0 %v875
    %v1491 = vpop.f32.mrf.mxu0
    %v1492 = vadd.f32 0.0, %v1491
    %1493 = vdwg.mxu0
    %1494 = vmatpush.msra.mxu0 %v1433
    %1495 = vmatpush.msra.mxu0 %v1429
    %1496 = vmatpush.msra.mxu0 %v1425
    %1497 = vmatpush.msra.mxu0 %v1421
    %1498 = vmatpush.msra.mxu0 %v1417
    %1499 = vmatpush.msra.mxu0 %v1413
    %1500 = vmatpush.msra.mxu0 %v1409
    %1501 = vmatpush.msra.mxu0 %v1405
    %1502 = vmatpush.msra.mxu0 %v1401
    %1503 = vmatpush.msra.mxu0 %v1397
    %1504 = vmatpush.msra.mxu0 %v1393
    %1505 = vmatpush.msra.mxu0 %v1389
    %1506 = vmatpush.msra.mxu0 %v1385
    %1507 = vmatpush.msra.mxu0 %v1381
    %1508 = vmatpush.msra.mxu0 %v1377
    %1509 = vmatpush.msra.mxu0 %v1373
    %1510 = vmatmul.f32.gmra.mxu0 %v875
    %v1511 = vpop.f32.mrf.mxu0
    %v1512 = vadd.f32 0.0, %v1511
    %1513 = vdwg.mxu0
    %v1514 = vadd.f32 %v1366, %v1452
    %v1515 = vadd.f32 %v1367, %v1472
    %v1516 = vadd.f32 %v1368, %v1492
    %v1517 = vadd.f32 %v1369, %v1512
    %v1518 = vld [vmem:[%s9 + $0x3c0] sm:$0xff]
    %v1519 = vld [vmem:[%s9 + $0x3c8] sm:$0xff]
    %v1520 = vld [vmem:[%s9 + $0x3d0] sm:$0xff]
    %v1521 = vld [vmem:[%s9 + $0x3d8] sm:$0xff]
    %v1522 = vld [vmem:[%s9 + $0x3e0] sm:$0xff]
    %v1523 = vld [vmem:[%s9 + $0x3e8] sm:$0xff]
    %v1524 = vld [vmem:[%s9 + $0x3f0] sm:$0xff]
    %v1525 = vld [vmem:[%s9 + $0x3f8] sm:$0xff]
    %v1526 = vld [vmem:[%s9 + $0x400] sm:$0xff]
    %v1527 = vld [vmem:[%s9 + $0x408] sm:$0xff]
    %v1528 = vld [vmem:[%s9 + $0x410] sm:$0xff]
    %v1529 = vld [vmem:[%s9 + $0x418] sm:$0xff]
    %v1530 = vld [vmem:[%s9 + $0x420] sm:$0xff]
    %v1531 = vld [vmem:[%s9 + $0x428] sm:$0xff]
    %v1532 = vld [vmem:[%s9 + $0x430] sm:$0xff]
    %v1533 = vld [vmem:[%s9 + $0x438] sm:$0xff]
    %v1534 = vld [vmem:[%s9 + $0x440] sm:$0xff]
    %v1535 = vld [vmem:[%s9 + $0x448] sm:$0xff]
    %v1536 = vld [vmem:[%s9 + $0x450] sm:$0xff]
    %v1537 = vld [vmem:[%s9 + $0x458] sm:$0xff]
    %v1538 = vld [vmem:[%s9 + $0x460] sm:$0xff]
    %v1539 = vld [vmem:[%s9 + $0x468] sm:$0xff]
    %v1540 = vld [vmem:[%s9 + $0x470] sm:$0xff]
    %v1541 = vld [vmem:[%s9 + $0x478] sm:$0xff]
    %v1542 = vld [vmem:[%s9 + $0x480] sm:$0xff]
    %v1543 = vld [vmem:[%s9 + $0x488] sm:$0xff]
    %v1544 = vld [vmem:[%s9 + $0x490] sm:$0xff]
    %v1545 = vld [vmem:[%s9 + $0x498] sm:$0xff]
    %v1546 = vld [vmem:[%s9 + $0x4a0] sm:$0xff]
    %v1547 = vld [vmem:[%s9 + $0x4a8] sm:$0xff]
    %v1548 = vld [vmem:[%s9 + $0x4b0] sm:$0xff]
    %v1549 = vld [vmem:[%s9 + $0x4b8] sm:$0xff]
    %v1550 = vld [vmem:[%s9 + $0x4c0] sm:$0xff]
    %v1551 = vld [vmem:[%s9 + $0x4c8] sm:$0xff]
    %v1552 = vld [vmem:[%s9 + $0x4d0] sm:$0xff]
    %v1553 = vld [vmem:[%s9 + $0x4d8] sm:$0xff]
    %v1554 = vld [vmem:[%s9 + $0x4e0] sm:$0xff]
    %v1555 = vld [vmem:[%s9 + $0x4e8] sm:$0xff]
    %v1556 = vld [vmem:[%s9 + $0x4f0] sm:$0xff]
    %v1557 = vld [vmem:[%s9 + $0x4f8] sm:$0xff]
    %v1558 = vld [vmem:[%s9 + $0x500] sm:$0xff]
    %v1559 = vld [vmem:[%s9 + $0x508] sm:$0xff]
    %v1560 = vld [vmem:[%s9 + $0x510] sm:$0xff]
    %v1561 = vld [vmem:[%s9 + $0x518] sm:$0xff]
    %v1562 = vld [vmem:[%s9 + $0x520] sm:$0xff]
    %v1563 = vld [vmem:[%s9 + $0x528] sm:$0xff]
    %v1564 = vld [vmem:[%s9 + $0x530] sm:$0xff]
    %v1565 = vld [vmem:[%s9 + $0x538] sm:$0xff]
    %v1566 = vld [vmem:[%s9 + $0x540] sm:$0xff]
    %v1567 = vld [vmem:[%s9 + $0x548] sm:$0xff]
    %v1568 = vld [vmem:[%s9 + $0x550] sm:$0xff]
    %v1569 = vld [vmem:[%s9 + $0x558] sm:$0xff]
    %v1570 = vld [vmem:[%s9 + $0x560] sm:$0xff]
    %v1571 = vld [vmem:[%s9 + $0x568] sm:$0xff]
    %v1572 = vld [vmem:[%s9 + $0x570] sm:$0xff]
    %v1573 = vld [vmem:[%s9 + $0x578] sm:$0xff]
    %v1574 = vld [vmem:[%s9 + $0x580] sm:$0xff]
    %v1575 = vld [vmem:[%s9 + $0x588] sm:$0xff]
    %v1576 = vld [vmem:[%s9 + $0x590] sm:$0xff]
    %v1577 = vld [vmem:[%s9 + $0x598] sm:$0xff]
    %v1578 = vld [vmem:[%s9 + $0x5a0] sm:$0xff]
    %v1579 = vld [vmem:[%s9 + $0x5a8] sm:$0xff]
    %v1580 = vld [vmem:[%s9 + $0x5b0] sm:$0xff]
    %v1581 = vld [vmem:[%s9 + $0x5b8] sm:$0xff]
    %v1583 = vrot.slane %v875, 2
    %1585 = vmatpush.msra.mxu0 %v1578
    %1586 = vmatpush.msra.mxu0 %v1574
    %1587 = vmatpush.msra.mxu0 %v1570
    %1588 = vmatpush.msra.mxu0 %v1566
    %1589 = vmatpush.msra.mxu0 %v1562
    %1590 = vmatpush.msra.mxu0 %v1558
    %1591 = vmatpush.msra.mxu0 %v1554
    %1592 = vmatpush.msra.mxu0 %v1550
    %1593 = vmatpush.msra.mxu0 %v1546
    %1594 = vmatpush.msra.mxu0 %v1542
    %1595 = vmatpush.msra.mxu0 %v1538
    %1596 = vmatpush.msra.mxu0 %v1534
    %1597 = vmatpush.msra.mxu0 %v1530
    %1598 = vmatpush.msra.mxu0 %v1526
    %1599 = vmatpush.msra.mxu0 %v1522
    %1600 = vmatpush.msra.mxu0 %v1518
    %1601 = vmatmul.f32.gmra.mxu0 %v1583
    %v1602 = vpop.f32.mrf.mxu0
    %v1603 = vadd.f32 0.0, %v1602
    %1604 = vdwg.mxu0
    %1605 = vmatpush.msra.mxu0 %v1579
    %1606 = vmatpush.msra.mxu0 %v1575
    %1607 = vmatpush.msra.mxu0 %v1571
    %1608 = vmatpush.msra.mxu0 %v1567
    %1609 = vmatpush.msra.mxu0 %v1563
    %1610 = vmatpush.msra.mxu0 %v1559
    %1611 = vmatpush.msra.mxu0 %v1555
    %1612 = vmatpush.msra.mxu0 %v1551
    %1613 = vmatpush.msra.mxu0 %v1547
    %1614 = vmatpush.msra.mxu0 %v1543
    %1615 = vmatpush.msra.mxu0 %v1539
    %1616 = vmatpush.msra.mxu0 %v1535
    %1617 = vmatpush.msra.mxu0 %v1531
    %1618 = vmatpush.msra.mxu0 %v1527
    %1619 = vmatpush.msra.mxu0 %v1523
    %1620 = vmatpush.msra.mxu0 %v1519
    %1621 = vmatmul.f32.gmra.mxu0 %v1583
    %v1622 = vpop.f32.mrf.mxu0
    %v1623 = vadd.f32 0.0, %v1622
    %1624 = vdwg.mxu0
    %1625 = vmatpush.msra.mxu0 %v1580
    %1626 = vmatpush.msra.mxu0 %v1576
    %1627 = vmatpush.msra.mxu0 %v1572
    %1628 = vmatpush.msra.mxu0 %v1568
    %1629 = vmatpush.msra.mxu0 %v1564
    %1630 = vmatpush.msra.mxu0 %v1560
    %1631 = vmatpush.msra.mxu0 %v1556
    %1632 = vmatpush.msra.mxu0 %v1552
    %1633 = vmatpush.msra.mxu0 %v1548
    %1634 = vmatpush.msra.mxu0 %v1544
    %1635 = vmatpush.msra.mxu0 %v1540
    %1636 = vmatpush.msra.mxu0 %v1536
    %1637 = vmatpush.msra.mxu0 %v1532
    %1638 = vmatpush.msra.mxu0 %v1528
    %1639 = vmatpush.msra.mxu0 %v1524
    %1640 = vmatpush.msra.mxu0 %v1520
    %1641 = vmatmul.f32.gmra.mxu0 %v1583
    %v1642 = vpop.f32.mrf.mxu0
    %v1643 = vadd.f32 0.0, %v1642
    %1644 = vdwg.mxu0
    %1645 = vmatpush.msra.mxu0 %v1581
    %1646 = vmatpush.msra.mxu0 %v1577
    %1647 = vmatpush.msra.mxu0 %v1573
    %1648 = vmatpush.msra.mxu0 %v1569
    %1649 = vmatpush.msra.mxu0 %v1565
    %1650 = vmatpush.msra.mxu0 %v1561
    %1651 = vmatpush.msra.mxu0 %v1557
    %1652 = vmatpush.msra.mxu0 %v1553
    %1653 = vmatpush.msra.mxu0 %v1549
    %1654 = vmatpush.msra.mxu0 %v1545
    %1655 = vmatpush.msra.mxu0 %v1541
    %1656 = vmatpush.msra.mxu0 %v1537
    %1657 = vmatpush.msra.mxu0 %v1533
    %1658 = vmatpush.msra.mxu0 %v1529
    %1659 = vmatpush.msra.mxu0 %v1525
    %1660 = vmatpush.msra.mxu0 %v1521
    %1661 = vmatmul.f32.gmra.mxu0 %v1583
    %v1662 = vpop.f32.mrf.mxu0
    %v1663 = vadd.f32 0.0, %v1662
    %1664 = vdwg.mxu0
    %v1665 = vadd.f32 %v1514, %v1603
    %v1666 = vadd.f32 %v1515, %v1623
    %v1667 = vadd.f32 %v1516, %v1643
    %v1668 = vadd.f32 %v1517, %v1663
    %s1669 = scalar_lea.vmem %s9, 1472
    %v1670 = vld [vmem:[%s1669] ss:$8 sm:$0xf]
    %v1672 = vperm.slane %v1670, 0
    %v1673 = vperm.slane %v1670, 1
    %v1674 = vperm.slane %v1670, 2
    %v1675 = vperm.slane %v1670, 3
    %v1680 = vadd.f32 %v1665, %v1672
    %v1681 = vadd.f32 %v1666, %v1673
    %v1682 = vadd.f32 %v1667, %v1674
    %v1683 = vadd.f32 %v1668, %v1675
    %v1684 = vmax.f32 %v1680, 0.0
    %v1685 = vmax.f32 %v1681, 0.0
    %v1686 = vmax.f32 %v1682, 0.0
    %v1687 = vmax.f32 %v1683, 0.0
    %v1688 = vld [vmem:[%s10] sm:$0xff]
    %v1689 = vld [vmem:[%s10 + $0x8] sm:$0xff]
    %v1690 = vld [vmem:[%s10 + $0x10] sm:$0xff]
    %v1691 = vld [vmem:[%s10 + $0x18] sm:$0xff]
    %v1692 = vld [vmem:[%s10 + $0x20] sm:$0xff]
    %v1693 = vld [vmem:[%s10 + $0x28] sm:$0xff]
    %v1694 = vld [vmem:[%s10 + $0x30] sm:$0xff]
    %v1695 = vld [vmem:[%s10 + $0x38] sm:$0xff]
    %v1696 = vld [vmem:[%s10 + $0x40] sm:$0xff]
    %v1697 = vld [vmem:[%s10 + $0x48] sm:$0xff]
    %v1698 = vld [vmem:[%s10 + $0x50] sm:$0xff]
    %v1699 = vld [vmem:[%s10 + $0x58] sm:$0xff]
    %v1700 = vld [vmem:[%s10 + $0x60] sm:$0xff]
    %v1701 = vld [vmem:[%s10 + $0x68] sm:$0xff]
    %v1702 = vld [vmem:[%s10 + $0x70] sm:$0xff]
    %v1703 = vld [vmem:[%s10 + $0x78] sm:$0xff]
    %v1704 = vld [vmem:[%s10 + $0x80] sm:$0xff]
    %v1705 = vld [vmem:[%s10 + $0x88] sm:$0xff]
    %v1706 = vld [vmem:[%s10 + $0x90] sm:$0xff]
    %v1707 = vld [vmem:[%s10 + $0x98] sm:$0xff]
    %v1708 = vld [vmem:[%s10 + $0xa0] sm:$0xff]
    %v1709 = vld [vmem:[%s10 + $0xa8] sm:$0xff]
    %v1710 = vld [vmem:[%s10 + $0xb0] sm:$0xff]
    %v1711 = vld [vmem:[%s10 + $0xb8] sm:$0xff]
    %v1712 = vld [vmem:[%s10 + $0xc0] sm:$0xff]
    %v1713 = vld [vmem:[%s10 + $0xc8] sm:$0xff]
    %v1714 = vld [vmem:[%s10 + $0xd0] sm:$0xff]
    %v1715 = vld [vmem:[%s10 + $0xd8] sm:$0xff]
    %v1716 = vld [vmem:[%s10 + $0xe0] sm:$0xff]
    %v1717 = vld [vmem:[%s10 + $0xe8] sm:$0xff]
    %v1718 = vld [vmem:[%s10 + $0xf0] sm:$0xff]
    %v1719 = vld [vmem:[%s10 + $0xf8] sm:$0xff]
    %v1720 = vld [vmem:[%s10 + $0x100] sm:$0xff]
    %v1721 = vld [vmem:[%s10 + $0x108] sm:$0xff]
    %v1722 = vld [vmem:[%s10 + $0x110] sm:$0xff]
    %v1723 = vld [vmem:[%s10 + $0x118] sm:$0xff]
    %v1724 = vld [vmem:[%s10 + $0x120] sm:$0xff]
    %v1725 = vld [vmem:[%s10 + $0x128] sm:$0xff]
    %v1726 = vld [vmem:[%s10 + $0x130] sm:$0xff]
    %v1727 = vld [vmem:[%s10 + $0x138] sm:$0xff]
    %v1728 = vld [vmem:[%s10 + $0x140] sm:$0xff]
    %v1729 = vld [vmem:[%s10 + $0x148] sm:$0xff]
    %v1730 = vld [vmem:[%s10 + $0x150] sm:$0xff]
    %v1731 = vld [vmem:[%s10 + $0x158] sm:$0xff]
    %v1732 = vld [vmem:[%s10 + $0x160] sm:$0xff]
    %v1733 = vld [vmem:[%s10 + $0x168] sm:$0xff]
    %v1734 = vld [vmem:[%s10 + $0x170] sm:$0xff]
    %v1735 = vld [vmem:[%s10 + $0x178] sm:$0xff]
    %v1736 = vld [vmem:[%s10 + $0x180] sm:$0xff]
    %v1737 = vld [vmem:[%s10 + $0x188] sm:$0xff]
    %v1738 = vld [vmem:[%s10 + $0x190] sm:$0xff]
    %v1739 = vld [vmem:[%s10 + $0x198] sm:$0xff]
    %v1740 = vld [vmem:[%s10 + $0x1a0] sm:$0xff]
    %v1741 = vld [vmem:[%s10 + $0x1a8] sm:$0xff]
    %v1742 = vld [vmem:[%s10 + $0x1b0] sm:$0xff]
    %v1743 = vld [vmem:[%s10 + $0x1b8] sm:$0xff]
    %v1744 = vld [vmem:[%s10 + $0x1c0] sm:$0xff]
    %v1745 = vld [vmem:[%s10 + $0x1c8] sm:$0xff]
    %v1746 = vld [vmem:[%s10 + $0x1d0] sm:$0xff]
    %v1747 = vld [vmem:[%s10 + $0x1d8] sm:$0xff]
    %v1748 = vld [vmem:[%s10 + $0x1e0] sm:$0xff]
    %v1749 = vld [vmem:[%s10 + $0x1e8] sm:$0xff]
    %v1750 = vld [vmem:[%s10 + $0x1f0] sm:$0xff]
    %v1751 = vld [vmem:[%s10 + $0x1f8] sm:$0xff]
    %v1752 = vld [vmem:[%s10 + $0x200] sm:$0xff]
    %v1753 = vld [vmem:[%s10 + $0x208] sm:$0xff]
    %v1754 = vld [vmem:[%s10 + $0x210] sm:$0xff]
    %v1755 = vld [vmem:[%s10 + $0x218] sm:$0xff]
    %v1756 = vld [vmem:[%s10 + $0x220] sm:$0xff]
    %v1757 = vld [vmem:[%s10 + $0x228] sm:$0xff]
    %v1758 = vld [vmem:[%s10 + $0x230] sm:$0xff]
    %v1759 = vld [vmem:[%s10 + $0x238] sm:$0xff]
    %v1760 = vld [vmem:[%s10 + $0x240] sm:$0xff]
    %v1761 = vld [vmem:[%s10 + $0x248] sm:$0xff]
    %v1762 = vld [vmem:[%s10 + $0x250] sm:$0xff]
    %v1763 = vld [vmem:[%s10 + $0x258] sm:$0xff]
    %v1764 = vld [vmem:[%s10 + $0x260] sm:$0xff]
    %v1765 = vld [vmem:[%s10 + $0x268] sm:$0xff]
    %v1766 = vld [vmem:[%s10 + $0x270] sm:$0xff]
    %v1767 = vld [vmem:[%s10 + $0x278] sm:$0xff]
    %v1768 = vld [vmem:[%s10 + $0x280] sm:$0xff]
    %v1769 = vld [vmem:[%s10 + $0x288] sm:$0xff]
    %v1770 = vld [vmem:[%s10 + $0x290] sm:$0xff]
    %v1771 = vld [vmem:[%s10 + $0x298] sm:$0xff]
    %v1772 = vld [vmem:[%s10 + $0x2a0] sm:$0xff]
    %v1773 = vld [vmem:[%s10 + $0x2a8] sm:$0xff]
    %v1774 = vld [vmem:[%s10 + $0x2b0] sm:$0xff]
    %v1775 = vld [vmem:[%s10 + $0x2b8] sm:$0xff]
    %v1776 = vld [vmem:[%s10 + $0x2c0] sm:$0xff]
    %v1777 = vld [vmem:[%s10 + $0x2c8] sm:$0xff]
    %v1778 = vld [vmem:[%s10 + $0x2d0] sm:$0xff]
    %v1779 = vld [vmem:[%s10 + $0x2d8] sm:$0xff]
    %v1780 = vld [vmem:[%s10 + $0x2e0] sm:$0xff]
    %v1781 = vld [vmem:[%s10 + $0x2e8] sm:$0xff]
    %v1782 = vld [vmem:[%s10 + $0x2f0] sm:$0xff]
    %v1783 = vld [vmem:[%s10 + $0x2f8] sm:$0xff]
    %v1784 = vld [vmem:[%s10 + $0x300] sm:$0xff]
    %v1785 = vld [vmem:[%s10 + $0x308] sm:$0xff]
    %v1786 = vld [vmem:[%s10 + $0x310] sm:$0xff]
    %v1787 = vld [vmem:[%s10 + $0x318] sm:$0xff]
    %v1788 = vld [vmem:[%s10 + $0x320] sm:$0xff]
    %v1789 = vld [vmem:[%s10 + $0x328] sm:$0xff]
    %v1790 = vld [vmem:[%s10 + $0x330] sm:$0xff]
    %v1791 = vld [vmem:[%s10 + $0x338] sm:$0xff]
    %v1792 = vld [vmem:[%s10 + $0x340] sm:$0xff]
    %v1793 = vld [vmem:[%s10 + $0x348] sm:$0xff]
    %v1794 = vld [vmem:[%s10 + $0x350] sm:$0xff]
    %v1795 = vld [vmem:[%s10 + $0x358] sm:$0xff]
    %v1796 = vld [vmem:[%s10 + $0x360] sm:$0xff]
    %v1797 = vld [vmem:[%s10 + $0x368] sm:$0xff]
    %v1798 = vld [vmem:[%s10 + $0x370] sm:$0xff]
    %v1799 = vld [vmem:[%s10 + $0x378] sm:$0xff]
    %v1800 = vld [vmem:[%s10 + $0x380] sm:$0xff]
    %v1801 = vld [vmem:[%s10 + $0x388] sm:$0xff]
    %v1802 = vld [vmem:[%s10 + $0x390] sm:$0xff]
    %v1803 = vld [vmem:[%s10 + $0x398] sm:$0xff]
    %v1804 = vld [vmem:[%s10 + $0x3a0] sm:$0xff]
    %v1805 = vld [vmem:[%s10 + $0x3a8] sm:$0xff]
    %v1806 = vld [vmem:[%s10 + $0x3b0] sm:$0xff]
    %v1807 = vld [vmem:[%s10 + $0x3b8] sm:$0xff]
    %v1808 = vld [vmem:[%s10 + $0x3c0] sm:$0xff]
    %v1809 = vld [vmem:[%s10 + $0x3c8] sm:$0xff]
    %v1810 = vld [vmem:[%s10 + $0x3d0] sm:$0xff]
    %v1811 = vld [vmem:[%s10 + $0x3d8] sm:$0xff]
    %v1812 = vld [vmem:[%s10 + $0x3e0] sm:$0xff]
    %v1813 = vld [vmem:[%s10 + $0x3e8] sm:$0xff]
    %v1814 = vld [vmem:[%s10 + $0x3f0] sm:$0xff]
    %v1815 = vld [vmem:[%s10 + $0x3f8] sm:$0xff]
    %s1816 = scalar_lea.vmem %s10, 1024
    %v1817 = vld [vmem:[%s1816] ss:$8 sm:$0x3]
    %v1819 = vperm.slane %v1817, 0
    %v1820 = vperm.slane %v1817, 1
    %1823 = vmatpush.msra.mxu0 %v1718
    %1824 = vmatpush.msra.mxu0 %v1716
    %1825 = vmatpush.msra.mxu0 %v1714
    %1826 = vmatpush.msra.mxu0 %v1712
    %1827 = vmatpush.msra.mxu0 %v1710
    %1828 = vmatpush.msra.mxu0 %v1708
    %1829 = vmatpush.msra.mxu0 %v1706
    %1830 = vmatpush.msra.mxu0 %v1704
    %1831 = vmatpush.msra.mxu0 %v1702
    %1832 = vmatpush.msra.mxu0 %v1700
    %1833 = vmatpush.msra.mxu0 %v1698
    %1834 = vmatpush.msra.mxu0 %v1696
    %1835 = vmatpush.msra.mxu0 %v1694
    %1836 = vmatpush.msra.mxu0 %v1692
    %1837 = vmatpush.msra.mxu0 %v1690
    %1838 = vmatpush.msra.mxu0 %v1688
    %1839 = vmatmul.f32.gmra.mxu0 %v1684
    %v1840 = vpop.f32.mrf.mxu0
    %v1841 = vadd.f32 %v1819, %v1840
    %1842 = vdwg.mxu0
    %1843 = vmatpush.msra.mxu0 %v1750
    %1844 = vmatpush.msra.mxu0 %v1748
    %1845 = vmatpush.msra.mxu0 %v1746
    %1846 = vmatpush.msra.mxu0 %v1744
    %1847 = vmatpush.msra.mxu0 %v1742
    %1848 = vmatpush.msra.mxu0 %v1740
    %1849 = vmatpush.msra.mxu0 %v1738
    %1850 = vmatpush.msra.mxu0 %v1736
    %1851 = vmatpush.msra.mxu0 %v1734
    %1852 = vmatpush.msra.mxu0 %v1732
    %1853 = vmatpush.msra.mxu0 %v1730
    %1854 = vmatpush.msra.mxu0 %v1728
    %1855 = vmatpush.msra.mxu0 %v1726
    %1856 = vmatpush.msra.mxu0 %v1724
    %1857 = vmatpush.msra.mxu0 %v1722
    %1858 = vmatpush.msra.mxu0 %v1720
    %1859 = vmatmul.f32.gmra.mxu0 %v1685
    %v1860 = vpop.f32.mrf.mxu0
    %v1861 = vadd.f32 %v1841, %v1860
    %1862 = vdwg.mxu0
    %1863 = vmatpush.msra.mxu0 %v1782
    %1864 = vmatpush.msra.mxu0 %v1780
    %1865 = vmatpush.msra.mxu0 %v1778
    %1866 = vmatpush.msra.mxu0 %v1776
    %1867 = vmatpush.msra.mxu0 %v1774
    %1868 = vmatpush.msra.mxu0 %v1772
    %1869 = vmatpush.msra.mxu0 %v1770
    %1870 = vmatpush.msra.mxu0 %v1768
    %1871 = vmatpush.msra.mxu0 %v1766
    %1872 = vmatpush.msra.mxu0 %v1764
    %1873 = vmatpush.msra.mxu0 %v1762
    %1874 = vmatpush.msra.mxu0 %v1760
    %1875 = vmatpush.msra.mxu0 %v1758
    %1876 = vmatpush.msra.mxu0 %v1756
    %1877 = vmatpush.msra.mxu0 %v1754
    %1878 = vmatpush.msra.mxu0 %v1752
    %1879 = vmatmul.f32.gmra.mxu0 %v1686
    %v1880 = vpop.f32.mrf.mxu0
    %v1881 = vadd.f32 %v1861, %v1880
    %1882 = vdwg.mxu0
    %1883 = vmatpush.msra.mxu0 %v1814
    %1884 = vmatpush.msra.mxu0 %v1812
    %1885 = vmatpush.msra.mxu0 %v1810
    %1886 = vmatpush.msra.mxu0 %v1808
    %1887 = vmatpush.msra.mxu0 %v1806
    %1888 = vmatpush.msra.mxu0 %v1804
    %1889 = vmatpush.msra.mxu0 %v1802
    %1890 = vmatpush.msra.mxu0 %v1800
    %1891 = vmatpush.msra.mxu0 %v1798
    %1892 = vmatpush.msra.mxu0 %v1796
    %1893 = vmatpush.msra.mxu0 %v1794
    %1894 = vmatpush.msra.mxu0 %v1792
    %1895 = vmatpush.msra.mxu0 %v1790
    %1896 = vmatpush.msra.mxu0 %v1788
    %1897 = vmatpush.msra.mxu0 %v1786
    %1898 = vmatpush.msra.mxu0 %v1784
    %1899 = vmatmul.f32.gmra.mxu0 %v1687
    %v1900 = vpop.f32.mrf.mxu0
    %v1901 = vadd.f32 %v1881, %v1900
    %1902 = vdwg.mxu0
    %1903 = vmatpush.msra.mxu0 %v1719
    %1904 = vmatpush.msra.mxu0 %v1717
    %1905 = vmatpush.msra.mxu0 %v1715
    %1906 = vmatpush.msra.mxu0 %v1713
    %1907 = vmatpush.msra.mxu0 %v1711
    %1908 = vmatpush.msra.mxu0 %v1709
    %1909 = vmatpush.msra.mxu0 %v1707
    %1910 = vmatpush.msra.mxu0 %v1705
    %1911 = vmatpush.msra.mxu0 %v1703
    %1912 = vmatpush.msra.mxu0 %v1701
    %1913 = vmatpush.msra.mxu0 %v1699
    %1914 = vmatpush.msra.mxu0 %v1697
    %1915 = vmatpush.msra.mxu0 %v1695
    %1916 = vmatpush.msra.mxu0 %v1693
    %1917 = vmatpush.msra.mxu0 %v1691
    %1918 = vmatpush.msra.mxu0 %v1689
    %1919 = vmatmul.f32.gmra.mxu0 %v1684
    %v1920 = vpop.f32.mrf.mxu0
    %v1921 = vadd.f32 %v1820, %v1920
    %1922 = vdwg.mxu0
    %1923 = vmatpush.msra.mxu0 %v1751
    %1924 = vmatpush.msra.mxu0 %v1749
    %1925 = vmatpush.msra.mxu0 %v1747
    %1926 = vmatpush.msra.mxu0 %v1745
    %1927 = vmatpush.msra.mxu0 %v1743
    %1928 = vmatpush.msra.mxu0 %v1741
    %1929 = vmatpush.msra.mxu0 %v1739
    %1930 = vmatpush.msra.mxu0 %v1737
    %1931 = vmatpush.msra.mxu0 %v1735
    %1932 = vmatpush.msra.mxu0 %v1733
    %1933 = vmatpush.msra.mxu0 %v1731
    %1934 = vmatpush.msra.mxu0 %v1729
    %1935 = vmatpush.msra.mxu0 %v1727
    %1936 = vmatpush.msra.mxu0 %v1725
    %1937 = vmatpush.msra.mxu0 %v1723
    %1938 = vmatpush.msra.mxu0 %v1721
    %1939 = vmatmul.f32.gmra.mxu0 %v1685
    %v1940 = vpop.f32.mrf.mxu0
    %v1941 = vadd.f32 %v1921, %v1940
    %1942 = vdwg.mxu0
    %1943 = vmatpush.msra.mxu0 %v1783
    %1944 = vmatpush.msra.mxu0 %v1781
    %1945 = vmatpush.msra.mxu0 %v1779
    %1946 = vmatpush.msra.mxu0 %v1777
    %1947 = vmatpush.msra.mxu0 %v1775
    %1948 = vmatpush.msra.mxu0 %v1773
    %1949 = vmatpush.msra.mxu0 %v1771
    %1950 = vmatpush.msra.mxu0 %v1769
    %1951 = vmatpush.msra.mxu0 %v1767
    %1952 = vmatpush.msra.mxu0 %v1765
    %1953 = vmatpush.msra.mxu0 %v1763
    %1954 = vmatpush.msra.mxu0 %v1761
    %1955 = vmatpush.msra.mxu0 %v1759
    %1956 = vmatpush.msra.mxu0 %v1757
    %1957 = vmatpush.msra.mxu0 %v1755
    %1958 = vmatpush.msra.mxu0 %v1753
    %1959 = vmatmul.f32.gmra.mxu0 %v1686
    %v1960 = vpop.f32.mrf.mxu0
    %v1961 = vadd.f32 %v1941, %v1960
    %1962 = vdwg.mxu0
    %1963 = vmatpush.msra.mxu0 %v1815
    %1964 = vmatpush.msra.mxu0 %v1813
    %1965 = vmatpush.msra.mxu0 %v1811
    %1966 = vmatpush.msra.mxu0 %v1809
    %1967 = vmatpush.msra.mxu0 %v1807
    %1968 = vmatpush.msra.mxu0 %v1805
    %1969 = vmatpush.msra.mxu0 %v1803
    %1970 = vmatpush.msra.mxu0 %v1801
    %1971 = vmatpush.msra.mxu0 %v1799
    %1972 = vmatpush.msra.mxu0 %v1797
    %1973 = vmatpush.msra.mxu0 %v1795
    %1974 = vmatpush.msra.mxu0 %v1793
    %1975 = vmatpush.msra.mxu0 %v1791
    %1976 = vmatpush.msra.mxu0 %v1789
    %1977 = vmatpush.msra.mxu0 %v1787
    %1978 = vmatpush.msra.mxu0 %v1785
    %1979 = vmatmul.f32.gmra.mxu0 %v1687
    %v1980 = vpop.f32.mrf.mxu0
    %v1981 = vadd.f32 %v1961, %v1980
    %1982 = vdwg.mxu0
    %v1983 = vmax.f32 %v1901, 0.0
    %v1984 = vmax.f32 %v1981, 0.0
    %v1985 = vld [vmem:[%s11] sm:$0xff]
    %v1986 = vld [vmem:[%s11 + $0x8] sm:$0xff]
    %v1987 = vld [vmem:[%s11 + $0x10] sm:$0xff]
    %v1988 = vld [vmem:[%s11 + $0x18] sm:$0xff]
    %v1989 = vld [vmem:[%s11 + $0x20] sm:$0xff]
    %v1990 = vld [vmem:[%s11 + $0x28] sm:$0xff]
    %v1991 = vld [vmem:[%s11 + $0x30] sm:$0xff]
    %v1992 = vld [vmem:[%s11 + $0x38] sm:$0xff]
    %v1993 = vld [vmem:[%s11 + $0x40] sm:$0xff]
    %v1994 = vld [vmem:[%s11 + $0x48] sm:$0xff]
    %v1995 = vld [vmem:[%s11 + $0x50] sm:$0xff]
    %v1996 = vld [vmem:[%s11 + $0x58] sm:$0xff]
    %v1997 = vld [vmem:[%s11 + $0x60] sm:$0xff]
    %v1998 = vld [vmem:[%s11 + $0x68] sm:$0xff]
    %v1999 = vld [vmem:[%s11 + $0x70] sm:$0xff]
    %v2000 = vld [vmem:[%s11 + $0x78] sm:$0xff]
    %v2001 = vld [vmem:[%s11 + $0x80] sm:$0xff]
    %v2002 = vld [vmem:[%s11 + $0x88] sm:$0xff]
    %v2003 = vld [vmem:[%s11 + $0x90] sm:$0xff]
    %v2004 = vld [vmem:[%s11 + $0x98] sm:$0xff]
    %v2005 = vld [vmem:[%s11 + $0xa0] sm:$0xff]
    %v2006 = vld [vmem:[%s11 + $0xa8] sm:$0xff]
    %v2007 = vld [vmem:[%s11 + $0xb0] sm:$0xff]
    %v2008 = vld [vmem:[%s11 + $0xb8] sm:$0xff]
    %v2009 = vld [vmem:[%s11 + $0xc0] sm:$0xff]
    %v2010 = vld [vmem:[%s11 + $0xc8] sm:$0xff]
    %v2011 = vld [vmem:[%s11 + $0xd0] sm:$0xff]
    %v2012 = vld [vmem:[%s11 + $0xd8] sm:$0xff]
    %v2013 = vld [vmem:[%s11 + $0xe0] sm:$0xff]
    %v2014 = vld [vmem:[%s11 + $0xe8] sm:$0xff]
    %v2015 = vld [vmem:[%s11 + $0xf0] sm:$0xff]
    %v2016 = vld [vmem:[%s11 + $0xf8] sm:$0xff]
    %v2017 = vld [vmem:[%s11 + $0x100] sm:$0x1]
    %v2018 = vperm.slane %v2017, 0
    %2019 = vmatpush.msra.mxu0 %v2000
    %2020 = vmatpush.msra.mxu0 %v1999
    %2021 = vmatpush.msra.mxu0 %v1998
    %2022 = vmatpush.msra.mxu0 %v1997
    %2023 = vmatpush.msra.mxu0 %v1996
    %2024 = vmatpush.msra.mxu0 %v1995
    %2025 = vmatpush.msra.mxu0 %v1994
    %2026 = vmatpush.msra.mxu0 %v1993
    %2027 = vmatpush.msra.mxu0 %v1992
    %2028 = vmatpush.msra.mxu0 %v1991
    %2029 = vmatpush.msra.mxu0 %v1990
    %2030 = vmatpush.msra.mxu0 %v1989
    %2031 = vmatpush.msra.mxu0 %v1988
    %2032 = vmatpush.msra.mxu0 %v1987
    %2033 = vmatpush.msra.mxu0 %v1986
    %2034 = vmatpush.msra.mxu0 %v1985
    %2035 = vmatmul.f32.gmra.mxu0 %v1983
    %v2036 = vpop.f32.mrf.mxu0
    %v2037 = vadd.f32 %v2018, %v2036
    %2038 = vdwg.mxu0
    %2039 = vmatpush.msra.mxu0 %v2016
    %2040 = vmatpush.msra.mxu0 %v2015
    %2041 = vmatpush.msra.mxu0 %v2014
    %2042 = vmatpush.msra.mxu0 %v2013
    %2043 = vmatpush.msra.mxu0 %v2012
    %2044 = vmatpush.msra.mxu0 %v2011
    %2045 = vmatpush.msra.mxu0 %v2010
    %2046 = vmatpush.msra.mxu0 %v2009
    %2047 = vmatpush.msra.mxu0 %v2008
    %2048 = vmatpush.msra.mxu0 %v2007
    %2049 = vmatpush.msra.mxu0 %v2006
    %2050 = vmatpush.msra.mxu0 %v2005
    %2051 = vmatpush.msra.mxu0 %v2004
    %2052 = vmatpush.msra.mxu0 %v2003
    %2053 = vmatpush.msra.mxu0 %v2002
    %2054 = vmatpush.msra.mxu0 %v2001
    %2055 = vmatmul.f32.gmra.mxu0 %v1984
    %v2056 = vpop.f32.mrf.mxu0
    %v2057 = vadd.f32 %v2037, %v2056
    %2058 = vdwg.mxu0
    %v2059 = vmax.f32 %v2057, 0.0
    %v2060 = vld [vmem:[%s12] sm:$0xff]
    %v2061 = vld [vmem:[%s12 + $0x8] sm:$0xff]
    %v2062 = vld [vmem:[%s12 + $0x10] sm:$0xff]
    %v2063 = vld [vmem:[%s12 + $0x18] sm:$0xff]
    %v2064 = vld [vmem:[%s12 + $0x20] sm:$0xff]
    %v2065 = vld [vmem:[%s12 + $0x28] sm:$0xff]
    %v2066 = vld [vmem:[%s12 + $0x30] sm:$0xff]
    %v2067 = vld [vmem:[%s12 + $0x38] sm:$0xff]
    %v2068 = vld [vmem:[%s12 + $0x40] sm:$0x1]
    %v2069 = vperm.slane %v2068, 0
    %vm2070 = vcmask 523264
    %v2072 = vsel %vm2070, %v2059, 0
    %2074 = vmatpush.msra.mxu0 0.0
    %2075 = vmatpush.msra.mxu0 0.0
    %2076 = vmatpush.msra.mxu0 0.0
    %2077 = vmatpush.msra.mxu0 0.0
    %2078 = vmatpush.msra.mxu0 0.0
    %2079 = vmatpush.msra.mxu0 0.0
    %2080 = vmatpush.msra.mxu0 0.0
    %2081 = vmatpush.msra.mxu0 0.0
    %2082 = vmatpush.msra.mxu0 %v2067
    %2083 = vmatpush.msra.mxu0 %v2066
    %2084 = vmatpush.msra.mxu0 %v2065
    %2085 = vmatpush.msra.mxu0 %v2064
    %2086 = vmatpush.msra.mxu0 %v2063
    %2087 = vmatpush.msra.mxu0 %v2062
    %2088 = vmatpush.msra.mxu0 %v2061
    %2089 = vmatpush.msra.mxu0 %v2060
    %2090 = vmatmul.f32.gmra.mxu0 %v2072
    %v2091 = vpop.f32.mrf.mxu0
    %v2092 = vadd.f32 %v2069, %v2091
    %2093 = vdwg.mxu0
    %vm2094 = vcmask 9216
    %2095 = vst.msk [vmem:[#allocation2] sm:$0x3] %vm2094, %v2092
    // Predicated region
    $region54: #{forward.1} parent=1 // pred_check
      _
    $region55: #{forward.1} parent=1 // pred_check_branch
      %2097 = sbr.rel (0) target = $region57
    $region56: #{forward.1} parent=1 // pred_region
      %2099 = vsyncadd [#allocation3], 0
      %s2101 = sshll.u32 [#allocation2], 4
      %s2102 = int_to_ptr.vmem [resolvable:$true] %s2101
      %s2103 = sshll.u32 %s13, 4
      %s2104 = int_to_ptr.hbm [resolvable:$true] %s2103
      %2106 = dma.vmem_to_hbm [thread:$0]  %s2102, 32, %s2104, [#allocation3]
    $region57: #{forward.1} parent=1 // pred_fallthru
      _
    // Predicated region
    $region58: #{forward.1} parent=1 // pred_check
      _
    $region59: #{forward.1} parent=1 // pred_check_branch
      %2108 = sbr.rel (0) target = $region61
    $region60: #{forward.1} parent=1 // pred_region
      %2110 = dma.done [#allocation3], 32
    $region61: #{forward.1} parent=1 // pred_fallthru
      _
    %2111 = vsyncpa [#allocation3], 1

</llo_original>
